<compile_context>
chip_gen: v6e
topology: v6e:2x2x1
jax: 0.10.0
libtpu: 0.0.40
codegen_flags: <defaults>
</compile_context>

<pallas_src>
import functools

import jax
import jax.numpy as jnp
import numpy as np
from jax import lax
from jax.experimental import pallas as pl
from jax.experimental.pallas import tpu as pltpu


def _round_up(x, m):
    return ((x + m - 1) // m) * m


def _ece_stats_kernel(x_ref, labels_ref, lowers_ref, uppers_ref, stats_ref):
    """Accumulate per-bin [count, conf_sum, acc_sum] for one (TM, C) row tile."""
    # Zero this core's resident accumulator block on its first tile.
    @pl.when(pl.program_id(1) == 0)
    def _():
        stats_ref[...] = jnp.zeros_like(stats_ref)

    x = x_ref[...].astype(jnp.float32)                                    # (TM, C)
    tm, c = x.shape

    # confidences / predictions: row-wise max and first-max index (torch.max ties).
    conf = jnp.max(x, axis=1, keepdims=True)                              # (TM, 1)
    col = lax.broadcasted_iota(jnp.int32, (tm, c), 1)                     # (TM, C)
    pred = jnp.min(jnp.where(x >= conf, col, jnp.int32(c)), axis=1,
                   keepdims=True)                                         # (TM, 1)

    # Labels arrive lane-dense as (1, TM); one tiny XLU transpose per tile.
    labels_col = jnp.transpose(labels_ref[...])                           # (TM, 1)
    acc = (pred == labels_col).astype(jnp.float32)                        # (TM, 1)

    # Bin membership: conf in (lower, upper]  (exact linspace boundaries).
    lowers = lowers_ref[...]                                              # (1, B)
    uppers = uppers_ref[...]                                              # (1, B)
    in_bin_f = jnp.logical_and(conf > lowers, conf <= uppers).astype(jnp.float32)

    # One MXU matmul replaces three masked cross-sublane reductions:
    #   [ones | conf | acc]^T @ in_bin  ->  (3, B) = [count, conf_sum, acc_sum]
    ones = jnp.ones((tm, 1), jnp.float32)
    lhs = jnp.concatenate([ones, conf, acc], axis=1)                      # (TM, 3)
    partial = lax.dot_general(
        lhs, in_bin_f, (((0,), (0,)), ((), ())),
        preferred_element_type=jnp.float32,
        precision=jax.lax.Precision.HIGHEST)                              # (3, B)

    stats_ref[...] = stats_ref[...] + partial[None, :, :]


@functools.partial(jax.jit, static_argnames=("n_bins", "block_rows", "num_cores"))
def ece_loss(softmaxes, labels, n_bins=30, block_rows=1024, num_cores=2):
    """Expected Calibration Error, reduction='mean'. Returns float32 of shape (1,)."""
    n, c = softmaxes.shape

    if softmaxes.dtype not in (jnp.float32, jnp.bfloat16):
        softmaxes = softmaxes.astype(jnp.float32)
    labels = labels.astype(jnp.int32)

    # --- tile-size selection (static, per call shapes) -------------------------
    # Lane-dense label blocks (1, TM) need TM to be a multiple of 128; keep the
    # double-buffered softmax tile within ~8 MiB so it fits every generation's
    # scoped-VMEM budget (v7x has only 64 MiB physical VMEM).
    itemsize = softmaxes.dtype.itemsize
    tm_cap = max(128, ((8 * 1024 * 1024) // max(1, 2 * c * itemsize)) // 128 * 128)
    tm = min(block_rows, tm_cap)
    tm = min(tm, _round_up(-(-n // num_cores), 128))  # don't over-pad tiny batches
    tm = max(128, (tm // 128) * 128)

    padded_n = _round_up(n, num_cores * tm)
    tiles_per_core = padded_n // (num_cores * tm)

    # Zero-padded rows have conf == 0, land in no bin, and contribute nothing.
    softmaxes = jnp.pad(softmaxes, ((0, padded_n - n), (0, 0)))
    labels_row = jnp.pad(labels, (0, padded_n - n),
                         constant_values=-1).reshape(1, padded_n)

    boundaries = jnp.linspace(0.0, 1.0, n_bins + 1, dtype=jnp.float32)
    lowers = boundaries[:-1].reshape(1, n_bins)
    uppers = boundaries[1:].reshape(1, n_bins)

    parts = pl.pallas_call(
        _ece_stats_kernel,
        out_shape=jax.ShapeDtypeStruct((num_cores, 3, n_bins), jnp.float32),
        grid_spec=pltpu.PrefetchScalarGridSpec(
            num_scalar_prefetch=0,
            grid=(num_cores, tiles_per_core),
            in_specs=[
                # streamed (TM, C) row tiles, auto double-buffered
                pl.BlockSpec((tm, c),
                             lambda ci, ti: (ci * tiles_per_core + ti, 0)),
                # lane-dense labels: one (1, TM) lane block per tile
                pl.BlockSpec((1, tm),
                             lambda ci, ti: (0, ci * tiles_per_core + ti)),
                # tiny, block-invariant bin boundaries
                pl.BlockSpec((1, n_bins), lambda ci, ti: (0, 0)),
                pl.BlockSpec((1, n_bins), lambda ci, ti: (0, 0)),
            ],
            # each core owns one (1, 3, n_bins) partial-stats slot, resident
            # across its 'arbitrary' accumulation axis
            out_specs=pl.BlockSpec((1, 3, n_bins), lambda ci, ti: (ci, 0, 0)),
        ),
        compiler_params=pltpu.CompilerParams(
            dimension_semantics=("parallel", "arbitrary"),
            vmem_limit_bytes=32 * 1024 * 1024,
        ),
    )(softmaxes, labels_row, lowers, uppers)

    # Tiny finalize (3 * n_bins values): combine per-core partials and reduce,
    # normalizing by the *real* N, with the count>0 guard applied only here.
    stats = jnp.sum(parts, axis=0)                       # (3, B)
    count, conf_sum, acc_sum = stats[0], stats[1], stats[2]
    prop = count / jnp.float32(n)
    safe = jnp.maximum(count, 1.0)
    gap = jnp.where(count > 0,
                    jnp.abs(conf_sum / safe - acc_sum / safe) * prop,
                    jnp.float32(0.0))
    return jnp.sum(gap).reshape(1)


def _ece_reference(softmaxes, labels, n_bins=30):
    """Pure-numpy reference mirroring the PyTorch loop (reduction='mean')."""
    softmaxes = np.asarray(softmaxes, dtype=np.float32)
    labels = np.asarray(labels)
    conf = softmaxes.max(axis=1)
    pred = softmaxes.argmax(axis=1)
    acc = (pred == labels).astype(np.float32)
    boundaries = np.linspace(0.0, 1.0, n_bins + 1, dtype=np.float32)
    ece = np.zeros(1, dtype=np.float32)
    for lo, hi in zip(boundaries[:-1], boundaries[1:]):
        in_bin = (conf > lo) & (conf <= hi)
        prop = in_bin.astype(np.float32).mean()
        if prop > 0:
            acc_in = acc[in_bin].mean()
            conf_in = conf[in_bin].mean()
            ece += np.abs(conf_in - acc_in) * prop
    return ece


if __name__ == "__main__":
    key = jax.random.PRNGKey(0)
    k_logits, k_labels = jax.random.split(key)

    N, C = 64, 8  # small synthetic batch of class probabilities
    logits = jax.random.normal(k_logits, (N, C), dtype=jnp.float32)
    softmaxes = jax.nn.softmax(logits, axis=1)
    labels = jax.random.randint(k_labels, (N,), 0, C, dtype=jnp.int32)

    ece = ece_loss(softmaxes, labels, n_bins=30)
    ece = jax.block_until_ready(ece)

    ref = _ece_reference(softmaxes, labels, n_bins=30)
    np.testing.assert_allclose(np.asarray(ece), ref, rtol=1e-4, atol=1e-6)

    print("KERNEL_OK")
</pallas_src>

<mosaic_0001>
module attributes {stable_mosaic.version = 11 : i64} {
  func.func @_ece_stats_kernel(%arg0: i32, %arg1: i32, %arg2: memref<128x8xf32, #tpu.memory_space<vmem>>, %arg3: memref<1x128xi32, #tpu.memory_space<vmem>>, %arg4: memref<1x30xf32, #tpu.memory_space<vmem>>, %arg5: memref<1x30xf32, #tpu.memory_space<vmem>>, %arg6: memref<1x3x30xf32, #tpu.memory_space<vmem>>) attributes {dimension_semantics = [#tpu.dimension_semantics<parallel>, #tpu.dimension_semantics<arbitrary>], iteration_bounds = array<i64: 2, 1>, scalar_prefetch = 0 : i64, scratch_operands = 0 : i64, tpu.core_type = #tpu.core_type<tc>, window_params = [{transform_indices = @transform_0, window_bounds = array<i64: 128, 8>}, {transform_indices = @transform_1, window_bounds = array<i64: 1, 128>}, {pipeline_mode = #tpu.pipeline_mode<synchronous>, transform_indices = @transform_2, window_bounds = array<i64: 1, 30>}, {pipeline_mode = #tpu.pipeline_mode<synchronous>, transform_indices = @transform_3, window_bounds = array<i64: 1, 30>}, {transform_indices = @transform_4, window_bounds = array<i64: 1, 3, 30>}]} {
    %c0_i32 = arith.constant 0 : i32
    %0 = arith.cmpi eq, %arg1, %c0_i32 : i32
    %1 = arith.extui %0 : i1 to i32
    %c0_i32_0 = arith.constant 0 : i32
    %2 = arith.cmpi ne, %1, %c0_i32_0 : i32
    scf.if %2 {
      %cst_17 = arith.constant 0.000000e+00 : f32
      %36 = vector.broadcast %cst_17 : f32 to vector<1x3x30xf32>
      %c0_18 = arith.constant 0 : index
      %c0_19 = arith.constant 0 : index
      %c0_20 = arith.constant 0 : index
      %37 = vector.load %arg6[%c0_18, %c0_19, %c0_20] : memref<1x3x30xf32, #tpu.memory_space<vmem>>, vector<1x3x30xf32>
      tpu.vector_store %arg6[%c0_18, %c0_19, %c0_20], %36 {strides = array<i32>} : memref<1x3x30xf32, #tpu.memory_space<vmem>>, vector<1x3x30xf32>,
    } else {
    }
    %c0 = arith.constant 0 : index
    %c0_1 = arith.constant 0 : index
    %3 = vector.load %arg2[%c0, %c0_1] : memref<128x8xf32, #tpu.memory_space<vmem>>, vector<128x8xf32>
    %cst = arith.constant dense<0xFF800000> : vector<128xf32>
    %4 = vector.multi_reduction <maximumf>, %3, %cst [1] : vector<128x8xf32> to vector<128xf32>
    %5 = vector.shape_cast %4 : vector<128xf32> to vector<128x1xf32>
    %6 = tpu.iota {dimensions = array<i32: 1>} : vector<128x8xi32>
    %7 = vector.broadcast %5 : vector<128x1xf32> to vector<128x8xf32>
    %8 = arith.cmpf oge, %3, %7 : vector<128x8xf32>
    %c8_i32 = arith.constant 8 : i32
    %9 = vector.broadcast %c8_i32 : i32 to vector<128x8xi32>
    %10 = arith.select %8, %6, %9 : vector<128x8xi1>, vector<128x8xi32>
    %cst_2 = arith.constant dense<2147483647> : vector<128xi32>
    %11 = vector.multi_reduction <minsi>, %10, %cst_2 [1] : vector<128x8xi32> to vector<128xi32>
    %12 = vector.shape_cast %11 : vector<128xi32> to vector<128x1xi32>
    %c0_3 = arith.constant 0 : index
    %c0_4 = arith.constant 0 : index
    %13 = vector.load %arg3[%c0_3, %c0_4] : memref<1x128xi32, #tpu.memory_space<vmem>>, vector<1x128xi32>
    %14 = tpu.transpose %13, [1, 0] : vector<1x128xi32> -> vector<128x1xi32>
    %15 = arith.cmpi eq, %12, %14 : vector<128x1xi32>
    %16 = arith.extui %15 : vector<128x1xi1> to vector<128x1xi32>
    %17 = arith.sitofp %16 : vector<128x1xi32> to vector<128x1xf32>
    %c0_5 = arith.constant 0 : index
    %c0_6 = arith.constant 0 : index
    %18 = vector.load %arg4[%c0_5, %c0_6] : memref<1x30xf32, #tpu.memory_space<vmem>>, vector<1x30xf32>
    %c0_7 = arith.constant 0 : index
    %c0_8 = arith.constant 0 : index
    %19 = vector.load %arg5[%c0_7, %c0_8] : memref<1x30xf32, #tpu.memory_space<vmem>>, vector<1x30xf32>
    %20 = vector.broadcast %5 : vector<128x1xf32> to vector<128x30xf32>
    %21 = vector.broadcast %18 : vector<1x30xf32> to vector<128x30xf32>
    %22 = arith.cmpf ogt, %20, %21 : vector<128x30xf32>
    %23 = vector.broadcast %5 : vector<128x1xf32> to vector<128x30xf32>
    %24 = vector.broadcast %19 : vector<1x30xf32> to vector<128x30xf32>
    %25 = arith.cmpf ole, %23, %24 : vector<128x30xf32>
    %26 = arith.andi %22, %25 : vector<128x30xi1>
    %27 = arith.extui %26 : vector<128x30xi1> to vector<128x30xi32>
    %28 = arith.sitofp %27 : vector<128x30xi32> to vector<128x30xf32>
    %cst_9 = arith.constant 1.000000e+00 : f32
    %29 = vector.broadcast %cst_9 : f32 to vector<128x1xf32>
    %30 = tpu.concatenate %29, %5, %17 in 1 : vector<128x1xf32>, vector<128x1xf32>, vector<128x1xf32> -> vector<128x3xf32>
    %cst_10 = arith.constant dense<0.000000e+00> : vector<3x30xf32>
    %31 = tpu.matmul %30, %28, %cst_10 {dimension_numbers = #tpu.dot_dimension_numbers<[0], [0], [1], [1], [0, 1, 1, 1], [], []>, precision = #tpu.contract_precision<fp32>} : vector<128x3xf32>, vector<128x30xf32>, vector<3x30xf32> -> vector<3x30xf32>
    %c0_11 = arith.constant 0 : index
    %c0_12 = arith.constant 0 : index
    %c0_13 = arith.constant 0 : index
    %32 = vector.load %arg6[%c0_11, %c0_12, %c0_13] : memref<1x3x30xf32, #tpu.memory_space<vmem>>, vector<1x3x30xf32>
    %33 = vector.shape_cast %31 : vector<3x30xf32> to vector<1x3x30xf32>
    %34 = arith.addf %32, %33 : vector<1x3x30xf32>
    %c0_14 = arith.constant 0 : index
    %c0_15 = arith.constant 0 : index
    %c0_16 = arith.constant 0 : index
    %35 = vector.load %arg6[%c0_14, %c0_15, %c0_16] : memref<1x3x30xf32, #tpu.memory_space<vmem>>, vector<1x3x30xf32>
    tpu.vector_store %arg6[%c0_14, %c0_15, %c0_16], %34 {strides = array<i32>} : memref<1x3x30xf32, #tpu.memory_space<vmem>>, vector<1x3x30xf32>,
    return
  }
  func.func @transform_0(%arg0: i32, %arg1: i32) -> (i32, i32) {
    %c1_i32 = arith.constant 1 : i32
    %0 = arith.muli %arg0, %c1_i32 : i32
    %1 = arith.addi %0, %arg1 : i32
    %c0_i32 = arith.constant 0 : i32
    %c0_i32_0 = arith.constant 0 : i32
    return %1, %c0_i32 : i32, i32
  }
  func.func @transform_1(%arg0: i32, %arg1: i32) -> (i32, i32) {
    %c1_i32 = arith.constant 1 : i32
    %0 = arith.muli %arg0, %c1_i32 : i32
    %1 = arith.addi %0, %arg1 : i32
    %c0_i32 = arith.constant 0 : i32
    %c0_i32_0 = arith.constant 0 : i32
    return %c0_i32, %1 : i32, i32
  }
  func.func @transform_2(%arg0: i32, %arg1: i32) -> (i32, i32) {
    %c0_i32 = arith.constant 0 : i32
    %c0_i32_0 = arith.constant 0 : i32
    %c0_i32_1 = arith.constant 0 : i32
    return %c0_i32, %c0_i32_0 : i32, i32
  }
  func.func @transform_3(%arg0: i32, %arg1: i32) -> (i32, i32) {
    %c0_i32 = arith.constant 0 : i32
    %c0_i32_0 = arith.constant 0 : i32
    %c0_i32_1 = arith.constant 0 : i32
    return %c0_i32, %c0_i32_0 : i32, i32
  }
  func.func @transform_4(%arg0: i32, %arg1: i32) -> (i32, i32, i32) {
    %c0_i32 = arith.constant 0 : i32
    %c0_i32_0 = arith.constant 0 : i32
    %c0_i32_1 = arith.constant 0 : i32
    return %arg0, %c0_i32, %c0_i32_0 : i32, i32, i32
  }
}

</mosaic_0001>

<llo_original>
// kernel: ece_loss.1
$region0: #{ece_loss.1}
  #allocation0 [shape = 'u32[]', space=smem, size = 0x4, offset = 0x4, fixed_abs, tag = 'smem constant byte address 0x4 - core index']
  #allocation1 [shape = 'u32[144,128]{1,0:T(1,128)}', space=vmem, size = 0x12000, scoped, tag = 'internal scratch']
  %s0 = inlined_call_operand.vmem [shape: f32[256,8], index: 0, kind: input, shape index: {}]
  %s1 = inlined_call_operand.vmem [shape: s32[1,256], index: 1, kind: input, shape index: {}]
  %s2 = inlined_call_operand.vmem [shape: f32[1,30], index: 2, kind: input, shape index: {}]
  %s3 = inlined_call_operand.vmem [shape: f32[1,30], index: 3, kind: input, shape index: {}]
  %s4 = inlined_call_operand.vmem [shape: f32[2,3,30], index: 4, kind: output, shape index: {}]
  %s5 = sld [smem:[#allocation0]]
  $region53: #{ece_loss.1} parent=0
    _
  %s7 = ssub.s32 1, %s5
  %s8 = scalar_select 0, %s7, %s5
  loop: start=0, step=1, limit=4
  $region2: #{ece_loss.1} parent=0 // loop_pre_header
    _
  $region3: #{ece_loss.1} parent=0 // loop_header
    %s10 = sphi 0, %s14
    %p11 = scmp.ge.s32.totalorder %s10, 4
    %s17 = sphi 0, %s29
    %s18 = sphi 0, %s25
    %s19 = sphi 0, %s17
    %s20 = sphi 0, %s18
    %s21 = sphi 0, %s19
    %s22 = sphi 0, %s20
    %s34 = sphi 0, %s36
    %s37 = sphi 0, %s34
    %s38 = sphi 0, %s37
    %s54 = sphi 0, %s38
    %s62 = sphi 0, %s64
    %s65 = sphi 0, %s62
    %s66 = sphi 0, %s65
    %s82 = sphi 0, %s66
    %s86 = sphi 0, %s86
    %s88 = sphi 0, %s86
    %s89 = sphi 0, %s88
    %s103 = sphi 0, %s89
    %s107 = sphi 0, %s107
    %s109 = sphi 0, %s107
    %s110 = sphi 0, %s109
    %s124 = sphi 0, %s110
    %s130 = sphi 0, %s132
    %s133 = sphi 0, %s130
    %s134 = sphi 0, %s133
    %s150 = sphi 0, %s134
  $region4: #{ece_loss.1} parent=0 // loop_header_branch
    %13 = sbr.rel (%p11) target = $region8
  $region5: #{ece_loss.1} parent=0 // loop_body
    %s15 = ssub.s32 %s10, 1
    %s16 = ssub.s32 %s10, 2
    %s23 = sadd.s32 1, %s18
    %p24 = scmp.ge.s32.totalorder %s23, 1
    %s25 = scalar_select %p24, 0, %s23
    %s26 = sadd.s32 1, %s17
    %s27 = scalar_select %p24, %s26, %s17
    %p28 = scmp.ge.s32.totalorder %s27, 2
    %s29 = scalar_select %p28, 0, %s27
    %s30 = sadd.s32 %s17, %s18
    %s31 = sadd.s32 %s29, %s25
    %s32 = ssub.s32 %s30, %s31
    %p33 = scmp.eq.s32.totalorder %s32, 0
    %s35 = sadd.s32 %s34, 1
    %s36 = scalar_select %p33, %s34, %s35
    %p39 = pneg %p33
    %p40 = scmp.eq.s32.totalorder %s10, 1
    %p41 = por %p39, %p40
    %p42 = scmp.ne.s32.totalorder %s34, %s37
    %p43 = scmp.eq.s32.totalorder %s10, 0
    %p44 = por %p42, %p43
    %p45 = scmp.ne.s32.totalorder %s34, %s37
    %p46 = scmp.eq.s32.totalorder %s15, 1
    %p47 = por %p45, %p46
    %p48 = scmp.ne.s32.totalorder %s37, %s38
    %p49 = scmp.eq.s32.totalorder %s15, 0
    %p50 = por %p48, %p49
    %p51 = scmp.ne.s32.totalorder %s37, %s38
    %p52 = scmp.eq.s32.totalorder %s16, 1
    %p53 = por %p51, %p52
    %p55 = scmp.ne.s32.totalorder %s38, %s54
    %p56 = scmp.eq.s32.totalorder %s16, 0
    %p57 = por %p55, %p56
    %s58 = sadd.s32 %s17, %s18
    %s59 = sadd.s32 %s29, %s25
    %s60 = ssub.s32 %s58, %s59
    %p61 = scmp.eq.s32.totalorder %s60, 0
    %s63 = sadd.s32 %s62, 1
    %s64 = scalar_select %p61, %s62, %s63
    %p67 = pneg %p61
    %p68 = scmp.eq.s32.totalorder %s10, 1
    %p69 = por %p67, %p68
    %p70 = scmp.ne.s32.totalorder %s62, %s65
    %p71 = scmp.eq.s32.totalorder %s10, 0
    %p72 = por %p70, %p71
    %p73 = scmp.ne.s32.totalorder %s62, %s65
    %p74 = scmp.eq.s32.totalorder %s15, 1
    %p75 = por %p73, %p74
    %p76 = scmp.ne.s32.totalorder %s65, %s66
    %p77 = scmp.eq.s32.totalorder %s15, 0
    %p78 = por %p76, %p77
    %p79 = scmp.ne.s32.totalorder %s65, %s66
    %p80 = scmp.eq.s32.totalorder %s16, 1
    %p81 = por %p79, %p80
    %p83 = scmp.ne.s32.totalorder %s66, %s82
    %p84 = scmp.eq.s32.totalorder %s16, 0
    %p85 = por %p83, %p84
    %s87 = sadd.s32 %s86, 1
    %p90 = scmp.eq.s32.totalorder %s10, 1
    %p91 = scmp.ne.s32.totalorder %s86, %s88
    %p92 = scmp.eq.s32.totalorder %s10, 0
    %p93 = por %p91, %p92
    %p94 = scmp.ne.s32.totalorder %s86, %s88
    %p95 = scmp.eq.s32.totalorder %s15, 1
    %p96 = por %p94, %p95
    %p97 = scmp.ne.s32.totalorder %s88, %s89
    %p98 = scmp.eq.s32.totalorder %s15, 0
    %p99 = por %p97, %p98
    %p100 = scmp.ne.s32.totalorder %s88, %s89
    %p101 = scmp.eq.s32.totalorder %s16, 1
    %p102 = por %p100, %p101
    %p104 = scmp.ne.s32.totalorder %s89, %s103
    %p105 = scmp.eq.s32.totalorder %s16, 0
    %p106 = por %p104, %p105
    %s108 = sadd.s32 %s107, 1
    %p111 = scmp.eq.s32.totalorder %s10, 1
    %p112 = scmp.ne.s32.totalorder %s107, %s109
    %p113 = scmp.eq.s32.totalorder %s10, 0
    %p114 = por %p112, %p113
    %p115 = scmp.ne.s32.totalorder %s107, %s109
    %p116 = scmp.eq.s32.totalorder %s15, 1
    %p117 = por %p115, %p116
    %p118 = scmp.ne.s32.totalorder %s109, %s110
    %p119 = scmp.eq.s32.totalorder %s15, 0
    %p120 = por %p118, %p119
    %p121 = scmp.ne.s32.totalorder %s109, %s110
    %p122 = scmp.eq.s32.totalorder %s16, 1
    %p123 = por %p121, %p122
    %p125 = scmp.ne.s32.totalorder %s110, %s124
    %p126 = scmp.eq.s32.totalorder %s16, 0
    %p127 = por %p125, %p126
    %s128 = ssub.s32 %s17, %s29
    %p129 = scmp.eq.s32.totalorder %s128, 0
    %s131 = sadd.s32 %s130, 1
    %s132 = scalar_select %p129, %s130, %s131
    %p135 = pneg %p129
    %p136 = scmp.eq.s32.totalorder %s10, 1
    %p137 = por %p135, %p136
    %p138 = scmp.ne.s32.totalorder %s130, %s133
    %p139 = scmp.eq.s32.totalorder %s10, 0
    %p140 = por %p138, %p139
    %p141 = scmp.ne.s32.totalorder %s130, %s133
    %p142 = scmp.eq.s32.totalorder %s15, 1
    %p143 = por %p141, %p142
    %p144 = scmp.ne.s32.totalorder %s133, %s134
    %p145 = scmp.eq.s32.totalorder %s15, 0
    %p146 = por %p144, %p145
    %p147 = scmp.ne.s32.totalorder %s133, %s134
    %p148 = scmp.eq.s32.totalorder %s16, 1
    %p149 = por %p147, %p148
    %p151 = scmp.ne.s32.totalorder %s134, %s150
    %p152 = scmp.eq.s32.totalorder %s16, 0
    %p153 = por %p151, %p152
    %p154 = scmp.le.s32.totalorder 1, %s10
    %p155 = scmp.lt.s32.totalorder %s10, 3
    %p156 = pnand %p154, %p155
    %p157 = pneg %p156
    // Predicated region
    $region9: #{ece_loss.1} parent=5 // pred_check
      _
    $region10: #{ece_loss.1} parent=5 // pred_check_branch
      %159 = sbr.rel (%p156) target = $region12
    $region11: #{ece_loss.1} parent=5 // pred_region
      %s160 = ssub.s32 %s10, 1
      // Predicated region
      $region13: #{ece_loss.1} parent=11 // pred_check
        %p161 = pneg %p99
      $region14: #{ece_loss.1} parent=11 // pred_check_branch
        %163 = sbr.rel (%p161) target = $region16
      $region15: #{ece_loss.1} parent=11 // pred_region
        _
      $region16: #{ece_loss.1} parent=11 // pred_fallthru
        _
      // Predicated region
      $region17: #{ece_loss.1} parent=11 // pred_check
        %p164 = pneg %p120
      $region18: #{ece_loss.1} parent=11 // pred_check_branch
        %166 = sbr.rel (%p164) target = $region20
      $region19: #{ece_loss.1} parent=11 // pred_region
        _
      $region20: #{ece_loss.1} parent=11 // pred_fallthru
        _
    $region12: #{ece_loss.1} parent=5 // pred_fallthru
      _
    %p167 = scmp.lt.s32.totalorder %s10, 2
    // Predicated region
    $region21: #{ece_loss.1} parent=5 // pred_check
      %p168 = pneg %p167
    $region22: #{ece_loss.1} parent=5 // pred_check_branch
      %170 = sbr.rel (%p168) target = $region24
    $region23: #{ece_loss.1} parent=5 // pred_region
      // Predicated region
      $region25: #{ece_loss.1} parent=23 // pred_check
        %p171 = pneg %p44
      $region26: #{ece_loss.1} parent=23 // pred_check_branch
        %173 = sbr.rel (%p171) target = $region28
      $region27: #{ece_loss.1} parent=23 // pred_region
        %s174 = sadd.s32 %s17, %s18
        %s175 = smul.u32 16, %s174
        %p176 = scmp.lt.s32.totalorder %s175, 31
        %s177 = scalar_select %p176, %s175, 31
        %s178 = smul.addr %s177, 8
        %s179 = scalar_lea.vmem %s0, %s178
        %s180 = sadd.s32 %s17, %s18
        %s181 = smul.u32 16, %s180
      $region28: #{ece_loss.1} parent=23 // pred_fallthru
        _
      // Predicated region
      $region29: #{ece_loss.1} parent=23 // pred_check
        %p182 = pneg %p72
      $region30: #{ece_loss.1} parent=23 // pred_check_branch
        %184 = sbr.rel (%p182) target = $region32
      $region31: #{ece_loss.1} parent=23 // pred_region
        %s185 = sadd.s32 %s17, %s18
        %p186 = scmp.lt.s32.totalorder %s185, 1
        %s187 = scalar_select %p186, %s185, 1
        %s188 = scalar_lea.vmem %s1, %s187
        %s189 = sadd.s32 %s17, %s18
      $region32: #{ece_loss.1} parent=23 // pred_fallthru
        _
    $region24: #{ece_loss.1} parent=5 // pred_fallthru
      _
    %p190 = scmp.le.s32.totalorder 1, %s10
    %p191 = scmp.lt.s32.totalorder %s10, 3
    %p192 = pnand %p190, %p191
    %p193 = pneg %p192
    // Predicated region
    $region33: #{ece_loss.1} parent=5 // pred_check
      _
    $region34: #{ece_loss.1} parent=5 // pred_check_branch
      %195 = sbr.rel (%p192) target = $region36
    $region35: #{ece_loss.1} parent=5 // pred_region
      %s196 = ssub.s32 %s10, 1
      %s197 = sadd.s32 %s19, %s20
      %s198 = smul.u32 16, %s197
      %p199 = scmp.lt.s32.totalorder %s198, 31
      %s200 = scalar_select %p199, %s198, 31
      %s201 = smul.addr %s200, 8
      %s202 = scalar_lea.vmem %s0, %s201
      %p203 = pneg %p50
      %p204 = pneg %p47
      %s205 = sadd.s32 %s19, %s20
      %p206 = scmp.lt.s32.totalorder %s205, 1
      %s207 = scalar_select %p206, %s205, 1
      %s208 = scalar_lea.vmem %s1, %s207
      %p209 = pneg %p78
      %p210 = pneg %p75
      %p211 = pneg %p99
      %p212 = pneg %p96
      %p213 = pneg %p120
      %p214 = pneg %p117
      %p215 = pneg %p146
      %p216 = pneg %p143
      %p217 = scmp.lt.s32.totalorder %s19, 1
      %s218 = scalar_select %p217, %s19, 1
      %s219 = smul.addr %s218, 4
      %s220 = scalar_lea.vmem %s4, %s219
      %s221 = sadd.s32 %s19, %s20
      %s222 = smul.u32 16, %s221
      %p223 = scmp.lt.s32.totalorder %s222, 31
      %s224 = scalar_select %p223, %s222, 31
      %s225 = smul.addr %s224, 8
      %s226 = scalar_lea.vmem %s0, %s225
      %s227 = sadd.s32 %s19, %s20
      %s228 = smul.u32 16, %s227
      %s229 = sadd.s32 %s19, %s20
      %p230 = scmp.lt.s32.totalorder %s229, 1
      %s231 = scalar_select %p230, %s229, 1
      %s232 = scalar_lea.vmem %s1, %s231
      %s233 = sadd.s32 %s19, %s20
      %p234 = scmp.lt.s32.totalorder %s19, 1
      %s235 = scalar_select %p234, %s19, 1
      %s236 = smul.addr %s235, 4
      %s237 = scalar_lea.vmem %s4, %s236
      %p238 = scmp.eq.s32.totalorder %s20, 0
      // Predicated region
      $region37: #{ece_loss.1} parent=35 // pred_check
        %p239 = pneg %p238
      $region38: #{ece_loss.1} parent=35 // pred_check_branch
        %241 = sbr.rel (%p239) target = $region40
      $region39: #{ece_loss.1} parent=35 // pred_region
        %vm242 = vcmask 239616
        %243 = vst.msk [vmem:[%s237] sm:$0x7] %vm242, 0.0
      $region40: #{ece_loss.1} parent=35 // pred_fallthru
        _
      %v244 = vld [vmem:[%s226] sm:$0xff]
      %v245 = vld [vmem:[%s226 + $0x8] sm:$0xff]
      %v246 = vld [vmem:[%s226 + $0x10] sm:$0xff]
      %v247 = vld [vmem:[%s226 + $0x18] sm:$0xff]
      %v248 = vld [vmem:[%s226 + $0x20] sm:$0xff]
      %v249 = vld [vmem:[%s226 + $0x28] sm:$0xff]
      %v250 = vld [vmem:[%s226 + $0x30] sm:$0xff]
      %v251 = vld [vmem:[%s226 + $0x38] sm:$0xff]
      %v252 = vld [vmem:[%s226 + $0x40] sm:$0xff]
      %v253 = vld [vmem:[%s226 + $0x48] sm:$0xff]
      %v254 = vld [vmem:[%s226 + $0x50] sm:$0xff]
      %v255 = vld [vmem:[%s226 + $0x58] sm:$0xff]
      %v256 = vld [vmem:[%s226 + $0x60] sm:$0xff]
      %v257 = vld [vmem:[%s226 + $0x68] sm:$0xff]
      %v258 = vld [vmem:[%s226 + $0x70] sm:$0xff]
      %v259 = vld [vmem:[%s226 + $0x78] sm:$0xff]
      %vm260 = vcmask 64512
      %v261 = vsel %vm260, %v244, -inf
      %262 = vmax.xlane.f32.xlu0 %v261
      %v263 = vpop.xlane.xlu0 %262
      %v264 = vsel %vm260, %v245, -inf
      %265 = vmax.xlane.f32.xlu0 %v264
      %v266 = vpop.xlane.xlu0 %265
      %v267 = vsel %vm260, %v246, -inf
      %268 = vmax.xlane.f32.xlu0 %v267
      %v269 = vpop.xlane.xlu0 %268
      %v270 = vsel %vm260, %v247, -inf
      %271 = vmax.xlane.f32.xlu0 %v270
      %v272 = vpop.xlane.xlu0 %271
      %v273 = vsel %vm260, %v248, -inf
      %274 = vmax.xlane.f32.xlu0 %v273
      %v275 = vpop.xlane.xlu0 %274
      %v276 = vsel %vm260, %v249, -inf
      %277 = vmax.xlane.f32.xlu0 %v276
      %v278 = vpop.xlane.xlu0 %277
      %v279 = vsel %vm260, %v250, -inf
      %280 = vmax.xlane.f32.xlu0 %v279
      %v281 = vpop.xlane.xlu0 %280
      %v282 = vsel %vm260, %v251, -inf
      %283 = vmax.xlane.f32.xlu0 %v282
      %v284 = vpop.xlane.xlu0 %283
      %v285 = vsel %vm260, %v252, -inf
      %286 = vmax.xlane.f32.xlu0 %v285
      %v287 = vpop.xlane.xlu0 %286
      %v288 = vsel %vm260, %v253, -inf
      %289 = vmax.xlane.f32.xlu0 %v288
      %v290 = vpop.xlane.xlu0 %289
      %v291 = vsel %vm260, %v254, -inf
      %292 = vmax.xlane.f32.xlu0 %v291
      %v293 = vpop.xlane.xlu0 %292
      %v294 = vsel %vm260, %v255, -inf
      %295 = vmax.xlane.f32.xlu0 %v294
      %v296 = vpop.xlane.xlu0 %295
      %v297 = vsel %vm260, %v256, -inf
      %298 = vmax.xlane.f32.xlu0 %v297
      %v299 = vpop.xlane.xlu0 %298
      %v300 = vsel %vm260, %v257, -inf
      %301 = vmax.xlane.f32.xlu0 %v300
      %v302 = vpop.xlane.xlu0 %301
      %v303 = vsel %vm260, %v258, -inf
      %304 = vmax.xlane.f32.xlu0 %v303
      %v305 = vpop.xlane.xlu0 %304
      %v306 = vsel %vm260, %v259, -inf
      %307 = vmax.xlane.f32.xlu0 %v306
      %v308 = vpop.xlane.xlu0 %307
      %v309 = vlaneseq
      %v310 = vand.u32 %v309, 127
      %vm311 = vcmp.ge.f32.partialorder %v244, %v263
      %vm312 = vcmp.ge.f32.partialorder %v245, %v266
      %vm313 = vcmp.ge.f32.partialorder %v246, %v269
      %vm314 = vcmp.ge.f32.partialorder %v247, %v272
      %vm315 = vcmp.ge.f32.partialorder %v248, %v275
      %vm316 = vcmp.ge.f32.partialorder %v249, %v278
      %vm317 = vcmp.ge.f32.partialorder %v250, %v281
      %vm318 = vcmp.ge.f32.partialorder %v251, %v284
      %vm319 = vcmp.ge.f32.partialorder %v252, %v287
      %vm320 = vcmp.ge.f32.partialorder %v253, %v290
      %vm321 = vcmp.ge.f32.partialorder %v254, %v293
      %vm322 = vcmp.ge.f32.partialorder %v255, %v296
      %vm323 = vcmp.ge.f32.partialorder %v256, %v299
      %vm324 = vcmp.ge.f32.partialorder %v257, %v302
      %vm325 = vcmp.ge.f32.partialorder %v258, %v305
      %vm326 = vcmp.ge.f32.partialorder %v259, %v308
      %v327 = vsel %vm311, %v310, 8
      %v328 = vsel %vm312, %v310, 8
      %v329 = vsel %vm313, %v310, 8
      %v330 = vsel %vm314, %v310, 8
      %v331 = vsel %vm315, %v310, 8
      %v332 = vsel %vm316, %v310, 8
      %v333 = vsel %vm317, %v310, 8
      %v334 = vsel %vm318, %v310, 8
      %v335 = vsel %vm319, %v310, 8
      %v336 = vsel %vm320, %v310, 8
      %v337 = vsel %vm321, %v310, 8
      %v338 = vsel %vm322, %v310, 8
      %v339 = vsel %vm323, %v310, 8
      %v340 = vsel %vm324, %v310, 8
      %v341 = vsel %vm325, %v310, 8
      %v342 = vsel %vm326, %v310, 8
      %v343 = vsel %vm260, %v327, 2147483647
      %v344 = vand.u32 %v343, 65535
      %v345 = vshra.s32 %v343, 16
      %v346 = vcvt.s32.f32 %v344
      %v347 = vcvt.s32.f32 %v345
      %348 = vmin.xlane.f32.xlu0 %v347
      %v349 = vpop.xlane.xlu0 %348
      %vm350 = vcmp.eq.f32.partialorder %v347, %v349
      %v351 = vsel %vm350, %v346, inf
      %352 = vmin.xlane.f32.xlu0 %v351
      %v353 = vpop.xlane.xlu0 %352
      %v354 = vcvt.f32.s32 %v353
      %v355 = vcvt.f32.s32 %v349
      %v356 = vshll.u32 %v355, 16
      %v357 = vadd.s32 %v356, %v354
      %v358 = vsel %vm260, %v328, 2147483647
      %v359 = vand.u32 %v358, 65535
      %v360 = vshra.s32 %v358, 16
      %v361 = vcvt.s32.f32 %v359
      %v362 = vcvt.s32.f32 %v360
      %363 = vmin.xlane.f32.xlu0 %v362
      %v364 = vpop.xlane.xlu0 %363
      %vm365 = vcmp.eq.f32.partialorder %v362, %v364
      %v366 = vsel %vm365, %v361, inf
      %367 = vmin.xlane.f32.xlu0 %v366
      %v368 = vpop.xlane.xlu0 %367
      %v369 = vcvt.f32.s32 %v368
      %v370 = vcvt.f32.s32 %v364
      %v371 = vshll.u32 %v370, 16
      %v372 = vadd.s32 %v371, %v369
      %v373 = vsel %vm260, %v329, 2147483647
      %v374 = vand.u32 %v373, 65535
      %v375 = vshra.s32 %v373, 16
      %v376 = vcvt.s32.f32 %v374
      %v377 = vcvt.s32.f32 %v375
      %378 = vmin.xlane.f32.xlu0 %v377
      %v379 = vpop.xlane.xlu0 %378
      %vm380 = vcmp.eq.f32.partialorder %v377, %v379
      %v381 = vsel %vm380, %v376, inf
      %382 = vmin.xlane.f32.xlu0 %v381
      %v383 = vpop.xlane.xlu0 %382
      %v384 = vcvt.f32.s32 %v383
      %v385 = vcvt.f32.s32 %v379
      %v386 = vshll.u32 %v385, 16
      %v387 = vadd.s32 %v386, %v384
      %v388 = vsel %vm260, %v330, 2147483647
      %v389 = vand.u32 %v388, 65535
      %v390 = vshra.s32 %v388, 16
      %v391 = vcvt.s32.f32 %v389
      %v392 = vcvt.s32.f32 %v390
      %393 = vmin.xlane.f32.xlu0 %v392
      %v394 = vpop.xlane.xlu0 %393
      %vm395 = vcmp.eq.f32.partialorder %v392, %v394
      %v396 = vsel %vm395, %v391, inf
      %397 = vmin.xlane.f32.xlu0 %v396
      %v398 = vpop.xlane.xlu0 %397
      %v399 = vcvt.f32.s32 %v398
      %v400 = vcvt.f32.s32 %v394
      %v401 = vshll.u32 %v400, 16
      %v402 = vadd.s32 %v401, %v399
      %v403 = vsel %vm260, %v331, 2147483647
      %v404 = vand.u32 %v403, 65535
      %v405 = vshra.s32 %v403, 16
      %v406 = vcvt.s32.f32 %v404
      %v407 = vcvt.s32.f32 %v405
      %408 = vmin.xlane.f32.xlu0 %v407
      %v409 = vpop.xlane.xlu0 %408
      %vm410 = vcmp.eq.f32.partialorder %v407, %v409
      %v411 = vsel %vm410, %v406, inf
      %412 = vmin.xlane.f32.xlu0 %v411
      %v413 = vpop.xlane.xlu0 %412
      %v414 = vcvt.f32.s32 %v413
      %v415 = vcvt.f32.s32 %v409
      %v416 = vshll.u32 %v415, 16
      %v417 = vadd.s32 %v416, %v414
      %v418 = vsel %vm260, %v332, 2147483647
      %v419 = vand.u32 %v418, 65535
      %v420 = vshra.s32 %v418, 16
      %v421 = vcvt.s32.f32 %v419
      %v422 = vcvt.s32.f32 %v420
      %423 = vmin.xlane.f32.xlu0 %v422
      %v424 = vpop.xlane.xlu0 %423
      %vm425 = vcmp.eq.f32.partialorder %v422, %v424
      %v426 = vsel %vm425, %v421, inf
      %427 = vmin.xlane.f32.xlu0 %v426
      %v428 = vpop.xlane.xlu0 %427
      %v429 = vcvt.f32.s32 %v428
      %v430 = vcvt.f32.s32 %v424
      %v431 = vshll.u32 %v430, 16
      %v432 = vadd.s32 %v431, %v429
      %v433 = vsel %vm260, %v333, 2147483647
      %v434 = vand.u32 %v433, 65535
      %v435 = vshra.s32 %v433, 16
      %v436 = vcvt.s32.f32 %v434
      %v437 = vcvt.s32.f32 %v435
      %438 = vmin.xlane.f32.xlu0 %v437
      %v439 = vpop.xlane.xlu0 %438
      %vm440 = vcmp.eq.f32.partialorder %v437, %v439
      %v441 = vsel %vm440, %v436, inf
      %442 = vmin.xlane.f32.xlu0 %v441
      %v443 = vpop.xlane.xlu0 %442
      %v444 = vcvt.f32.s32 %v443
      %v445 = vcvt.f32.s32 %v439
      %v446 = vshll.u32 %v445, 16
      %v447 = vadd.s32 %v446, %v444
      %v448 = vsel %vm260, %v334, 2147483647
      %v449 = vand.u32 %v448, 65535
      %v450 = vshra.s32 %v448, 16
      %v451 = vcvt.s32.f32 %v449
      %v452 = vcvt.s32.f32 %v450
      %453 = vmin.xlane.f32.xlu0 %v452
      %v454 = vpop.xlane.xlu0 %453
      %vm455 = vcmp.eq.f32.partialorder %v452, %v454
      %v456 = vsel %vm455, %v451, inf
      %457 = vmin.xlane.f32.xlu0 %v456
      %v458 = vpop.xlane.xlu0 %457
      %v459 = vcvt.f32.s32 %v458
      %v460 = vcvt.f32.s32 %v454
      %v461 = vshll.u32 %v460, 16
      %v462 = vadd.s32 %v461, %v459
      %v463 = vsel %vm260, %v335, 2147483647
      %v464 = vand.u32 %v463, 65535
      %v465 = vshra.s32 %v463, 16
      %v466 = vcvt.s32.f32 %v464
      %v467 = vcvt.s32.f32 %v465
      %468 = vmin.xlane.f32.xlu0 %v467
      %v469 = vpop.xlane.xlu0 %468
      %vm470 = vcmp.eq.f32.partialorder %v467, %v469
      %v471 = vsel %vm470, %v466, inf
      %472 = vmin.xlane.f32.xlu0 %v471
      %v473 = vpop.xlane.xlu0 %472
      %v474 = vcvt.f32.s32 %v473
      %v475 = vcvt.f32.s32 %v469
      %v476 = vshll.u32 %v475, 16
      %v477 = vadd.s32 %v476, %v474
      %v478 = vsel %vm260, %v336, 2147483647
      %v479 = vand.u32 %v478, 65535
      %v480 = vshra.s32 %v478, 16
      %v481 = vcvt.s32.f32 %v479
      %v482 = vcvt.s32.f32 %v480
      %483 = vmin.xlane.f32.xlu0 %v482
      %v484 = vpop.xlane.xlu0 %483
      %vm485 = vcmp.eq.f32.partialorder %v482, %v484
      %v486 = vsel %vm485, %v481, inf
      %487 = vmin.xlane.f32.xlu0 %v486
      %v488 = vpop.xlane.xlu0 %487
      %v489 = vcvt.f32.s32 %v488
      %v490 = vcvt.f32.s32 %v484
      %v491 = vshll.u32 %v490, 16
      %v492 = vadd.s32 %v491, %v489
      %v493 = vsel %vm260, %v337, 2147483647
      %v494 = vand.u32 %v493, 65535
      %v495 = vshra.s32 %v493, 16
      %v496 = vcvt.s32.f32 %v494
      %v497 = vcvt.s32.f32 %v495
      %498 = vmin.xlane.f32.xlu0 %v497
      %v499 = vpop.xlane.xlu0 %498
      %vm500 = vcmp.eq.f32.partialorder %v497, %v499
      %v501 = vsel %vm500, %v496, inf
      %502 = vmin.xlane.f32.xlu0 %v501
      %v503 = vpop.xlane.xlu0 %502
      %v504 = vcvt.f32.s32 %v503
      %v505 = vcvt.f32.s32 %v499
      %v506 = vshll.u32 %v505, 16
      %v507 = vadd.s32 %v506, %v504
      %v508 = vsel %vm260, %v338, 2147483647
      %v509 = vand.u32 %v508, 65535
      %v510 = vshra.s32 %v508, 16
      %v511 = vcvt.s32.f32 %v509
      %v512 = vcvt.s32.f32 %v510
      %513 = vmin.xlane.f32.xlu0 %v512
      %v514 = vpop.xlane.xlu0 %513
      %vm515 = vcmp.eq.f32.partialorder %v512, %v514
      %v516 = vsel %vm515, %v511, inf
      %517 = vmin.xlane.f32.xlu0 %v516
      %v518 = vpop.xlane.xlu0 %517
      %v519 = vcvt.f32.s32 %v518
      %v520 = vcvt.f32.s32 %v514
      %v521 = vshll.u32 %v520, 16
      %v522 = vadd.s32 %v521, %v519
      %v523 = vsel %vm260, %v339, 2147483647
      %v524 = vand.u32 %v523, 65535
      %v525 = vshra.s32 %v523, 16
      %v526 = vcvt.s32.f32 %v524
      %v527 = vcvt.s32.f32 %v525
      %528 = vmin.xlane.f32.xlu0 %v527
      %v529 = vpop.xlane.xlu0 %528
      %vm530 = vcmp.eq.f32.partialorder %v527, %v529
      %v531 = vsel %vm530, %v526, inf
      %532 = vmin.xlane.f32.xlu0 %v531
      %v533 = vpop.xlane.xlu0 %532
      %v534 = vcvt.f32.s32 %v533
      %v535 = vcvt.f32.s32 %v529
      %v536 = vshll.u32 %v535, 16
      %v537 = vadd.s32 %v536, %v534
      %v538 = vsel %vm260, %v340, 2147483647
      %v539 = vand.u32 %v538, 65535
      %v540 = vshra.s32 %v538, 16
      %v541 = vcvt.s32.f32 %v539
      %v542 = vcvt.s32.f32 %v540
      %543 = vmin.xlane.f32.xlu0 %v542
      %v544 = vpop.xlane.xlu0 %543
      %vm545 = vcmp.eq.f32.partialorder %v542, %v544
      %v546 = vsel %vm545, %v541, inf
      %547 = vmin.xlane.f32.xlu0 %v546
      %v548 = vpop.xlane.xlu0 %547
      %v549 = vcvt.f32.s32 %v548
      %v550 = vcvt.f32.s32 %v544
      %v551 = vshll.u32 %v550, 16
      %v552 = vadd.s32 %v551, %v549
      %v553 = vsel %vm260, %v341, 2147483647
      %v554 = vand.u32 %v553, 65535
      %v555 = vshra.s32 %v553, 16
      %v556 = vcvt.s32.f32 %v554
      %v557 = vcvt.s32.f32 %v555
      %558 = vmin.xlane.f32.xlu0 %v557
      %v559 = vpop.xlane.xlu0 %558
      %vm560 = vcmp.eq.f32.partialorder %v557, %v559
      %v561 = vsel %vm560, %v556, inf
      %562 = vmin.xlane.f32.xlu0 %v561
      %v563 = vpop.xlane.xlu0 %562
      %v564 = vcvt.f32.s32 %v563
      %v565 = vcvt.f32.s32 %v559
      %v566 = vshll.u32 %v565, 16
      %v567 = vadd.s32 %v566, %v564
      %v568 = vsel %vm260, %v342, 2147483647
      %v569 = vand.u32 %v568, 65535
      %v570 = vshra.s32 %v568, 16
      %v571 = vcvt.s32.f32 %v569
      %v572 = vcvt.s32.f32 %v570
      %573 = vmin.xlane.f32.xlu0 %v572
      %v574 = vpop.xlane.xlu0 %573
      %vm575 = vcmp.eq.f32.partialorder %v572, %v574
      %v576 = vsel %vm575, %v571, inf
      %577 = vmin.xlane.f32.xlu0 %v576
      %v578 = vpop.xlane.xlu0 %577
      %v579 = vcvt.f32.s32 %v578
      %v580 = vcvt.f32.s32 %v574
      %v581 = vshll.u32 %v580, 16
      %v582 = vadd.s32 %v581, %v579
      %v583 = vld [vmem:[%s232] sm:$0x1]
      %584 = vxpose.xlu0.b32.start [1/16] %v583, 128
      %585 = vxpose.xlu0.b32.cont [2/16] 0, 128
      %586 = vxpose.xlu0.b32.cont [3/16] 0, 128
      %587 = vxpose.xlu0.b32.cont [4/16] 0, 128
      %588 = vxpose.xlu0.b32.cont [5/16] 0, 128
      %589 = vxpose.xlu0.b32.cont [6/16] 0, 128
      %590 = vxpose.xlu0.b32.cont [7/16] 0, 128
      %591 = vxpose.xlu0.b32.cont [8/16] 0, 128
      %592 = vxpose.xlu0.b32.cont [9/16] 0, 128
      %593 = vxpose.xlu0.b32.cont [10/16] 0, 128
      %594 = vxpose.xlu0.b32.cont [11/16] 0, 128
      %595 = vxpose.xlu0.b32.cont [12/16] 0, 128
      %596 = vxpose.xlu0.b32.cont [13/16] 0, 128
      %597 = vxpose.xlu0.b32.cont [14/16] 0, 128
      %598 = vxpose.xlu0.b32.cont [15/16] 0, 128
      %599 = vxpose.xlu0.b32.end [16/16] 0, 128
      %v600 = vpop.trf.xlu0
      %v601 = vpop.trf.xlu0
      %v602 = vpop.trf.xlu0
      %v603 = vpop.trf.xlu0
      %v604 = vpop.trf.xlu0
      %v605 = vpop.trf.xlu0
      %v606 = vpop.trf.xlu0
      %v607 = vpop.trf.xlu0
      %v608 = vpop.trf.xlu0
      %v609 = vpop.trf.xlu0
      %v610 = vpop.trf.xlu0
      %v611 = vpop.trf.xlu0
      %v612 = vpop.trf.xlu0
      %v613 = vpop.trf.xlu0
      %v614 = vpop.trf.xlu0
      %v615 = vpop.trf.xlu0
      %vm616 = vcmp.eq.s32.totalorder %v357, %v600
      %vm617 = vcmp.eq.s32.totalorder %v372, %v601
      %vm618 = vcmp.eq.s32.totalorder %v387, %v602
      %vm619 = vcmp.eq.s32.totalorder %v402, %v603
      %vm620 = vcmp.eq.s32.totalorder %v417, %v604
      %vm621 = vcmp.eq.s32.totalorder %v432, %v605
      %vm622 = vcmp.eq.s32.totalorder %v447, %v606
      %vm623 = vcmp.eq.s32.totalorder %v462, %v607
      %vm624 = vcmp.eq.s32.totalorder %v477, %v608
      %vm625 = vcmp.eq.s32.totalorder %v492, %v609
      %vm626 = vcmp.eq.s32.totalorder %v507, %v610
      %vm627 = vcmp.eq.s32.totalorder %v522, %v611
      %vm628 = vcmp.eq.s32.totalorder %v537, %v612
      %vm629 = vcmp.eq.s32.totalorder %v552, %v613
      %vm630 = vcmp.eq.s32.totalorder %v567, %v614
      %vm631 = vcmp.eq.s32.totalorder %v582, %v615
      %v632 = vsel %vm616, 1, 0
      %v633 = vsel %vm617, 1, 0
      %v634 = vsel %vm618, 1, 0
      %v635 = vsel %vm619, 1, 0
      %v636 = vsel %vm620, 1, 0
      %v637 = vsel %vm621, 1, 0
      %v638 = vsel %vm622, 1, 0
      %v639 = vsel %vm623, 1, 0
      %v640 = vsel %vm624, 1, 0
      %v641 = vsel %vm625, 1, 0
      %v642 = vsel %vm626, 1, 0
      %v643 = vsel %vm627, 1, 0
      %v644 = vsel %vm628, 1, 0
      %v645 = vsel %vm629, 1, 0
      %v646 = vsel %vm630, 1, 0
      %v647 = vsel %vm631, 1, 0
      %v648 = vcvt.s32.f32 %v632
      %v649 = vcvt.s32.f32 %v633
      %v650 = vcvt.s32.f32 %v634
      %v651 = vcvt.s32.f32 %v635
      %v652 = vcvt.s32.f32 %v636
      %v653 = vcvt.s32.f32 %v637
      %v654 = vcvt.s32.f32 %v638
      %v655 = vcvt.s32.f32 %v639
      %v656 = vcvt.s32.f32 %v640
      %v657 = vcvt.s32.f32 %v641
      %v658 = vcvt.s32.f32 %v642
      %v659 = vcvt.s32.f32 %v643
      %v660 = vcvt.s32.f32 %v644
      %v661 = vcvt.s32.f32 %v645
      %v662 = vcvt.s32.f32 %v646
      %v663 = vcvt.s32.f32 %v647
      %v664 = vld [vmem:[%s2] sm:$0x1]
      %v665 = vld [vmem:[%s3] sm:$0x1]
      %v667 = vlaneseq
      %v668 = vshrl.u32 %v667, 7
      %v669 = vsub.s32 0, %v668
      %v670 = vrot.slane %v664, %v669
      %vm672 = vcmp.gt.f32.partialorder %v263, %v670
      %vm673 = vcmp.gt.f32.partialorder %v266, %v670
      %vm674 = vcmp.gt.f32.partialorder %v269, %v670
      %vm675 = vcmp.gt.f32.partialorder %v272, %v670
      %vm676 = vcmp.gt.f32.partialorder %v275, %v670
      %vm677 = vcmp.gt.f32.partialorder %v278, %v670
      %vm678 = vcmp.gt.f32.partialorder %v281, %v670
      %vm679 = vcmp.gt.f32.partialorder %v284, %v670
      %vm680 = vcmp.gt.f32.partialorder %v287, %v670
      %vm681 = vcmp.gt.f32.partialorder %v290, %v670
      %vm682 = vcmp.gt.f32.partialorder %v293, %v670
      %vm683 = vcmp.gt.f32.partialorder %v296, %v670
      %vm684 = vcmp.gt.f32.partialorder %v299, %v670
      %vm685 = vcmp.gt.f32.partialorder %v302, %v670
      %vm686 = vcmp.gt.f32.partialorder %v305, %v670
      %vm687 = vcmp.gt.f32.partialorder %v308, %v670
      %v689 = vlaneseq
      %v690 = vshrl.u32 %v689, 7
      %v691 = vsub.s32 0, %v690
      %v692 = vrot.slane %v665, %v691
      %vm694 = vcmp.le.f32.partialorder %v263, %v692
      %vm695 = vcmp.le.f32.partialorder %v266, %v692
      %vm696 = vcmp.le.f32.partialorder %v269, %v692
      %vm697 = vcmp.le.f32.partialorder %v272, %v692
      %vm698 = vcmp.le.f32.partialorder %v275, %v692
      %vm699 = vcmp.le.f32.partialorder %v278, %v692
      %vm700 = vcmp.le.f32.partialorder %v281, %v692
      %vm701 = vcmp.le.f32.partialorder %v284, %v692
      %vm702 = vcmp.le.f32.partialorder %v287, %v692
      %vm703 = vcmp.le.f32.partialorder %v290, %v692
      %vm704 = vcmp.le.f32.partialorder %v293, %v692
      %vm705 = vcmp.le.f32.partialorder %v296, %v692
      %vm706 = vcmp.le.f32.partialorder %v299, %v692
      %vm707 = vcmp.le.f32.partialorder %v302, %v692
      %vm708 = vcmp.le.f32.partialorder %v305, %v692
      %vm709 = vcmp.le.f32.partialorder %v308, %v692
      %vm710 = vmand %vm672, %vm694
      %vm711 = vmand %vm673, %vm695
      %vm712 = vmand %vm674, %vm696
      %vm713 = vmand %vm675, %vm697
      %vm714 = vmand %vm676, %vm698
      %vm715 = vmand %vm677, %vm699
      %vm716 = vmand %vm678, %vm700
      %vm717 = vmand %vm679, %vm701
      %vm718 = vmand %vm680, %vm702
      %vm719 = vmand %vm681, %vm703
      %vm720 = vmand %vm682, %vm704
      %vm721 = vmand %vm683, %vm705
      %vm722 = vmand %vm684, %vm706
      %vm723 = vmand %vm685, %vm707
      %vm724 = vmand %vm686, %vm708
      %vm725 = vmand %vm687, %vm709
      %v726 = vsel %vm710, 1, 0
      %v727 = vsel %vm711, 1, 0
      %v728 = vsel %vm712, 1, 0
      %v729 = vsel %vm713, 1, 0
      %v730 = vsel %vm714, 1, 0
      %v731 = vsel %vm715, 1, 0
      %v732 = vsel %vm716, 1, 0
      %v733 = vsel %vm717, 1, 0
      %v734 = vsel %vm718, 1, 0
      %v735 = vsel %vm719, 1, 0
      %v736 = vsel %vm720, 1, 0
      %v737 = vsel %vm721, 1, 0
      %v738 = vsel %vm722, 1, 0
      %v739 = vsel %vm723, 1, 0
      %v740 = vsel %vm724, 1, 0
      %v741 = vsel %vm725, 1, 0
      %v742 = vcvt.s32.f32 %v726
      %v743 = vcvt.s32.f32 %v727
      %v744 = vcvt.s32.f32 %v728
      %v745 = vcvt.s32.f32 %v729
      %v746 = vcvt.s32.f32 %v730
      %v747 = vcvt.s32.f32 %v731
      %v748 = vcvt.s32.f32 %v732
      %v749 = vcvt.s32.f32 %v733
      %v750 = vcvt.s32.f32 %v734
      %v751 = vcvt.s32.f32 %v735
      %v752 = vcvt.s32.f32 %v736
      %v753 = vcvt.s32.f32 %v737
      %v754 = vcvt.s32.f32 %v738
      %v755 = vcvt.s32.f32 %v739
      %v756 = vcvt.s32.f32 %v740
      %v757 = vcvt.s32.f32 %v741
      %774 = vrot.lane.b32.xlu0 %v648, 2
      %v775 = vpop.permute.xlu0 %774
      %776 = vrot.lane.b32.xlu0 %v649, 2
      %v777 = vpop.permute.xlu0 %776
      %778 = vrot.lane.b32.xlu0 %v650, 2
      %v779 = vpop.permute.xlu0 %778
      %780 = vrot.lane.b32.xlu0 %v651, 2
      %v781 = vpop.permute.xlu0 %780
      %782 = vrot.lane.b32.xlu0 %v652, 2
      %v783 = vpop.permute.xlu0 %782
      %784 = vrot.lane.b32.xlu0 %v653, 2
      %v785 = vpop.permute.xlu0 %784
      %786 = vrot.lane.b32.xlu0 %v654, 2
      %v787 = vpop.permute.xlu0 %786
      %788 = vrot.lane.b32.xlu0 %v655, 2
      %v789 = vpop.permute.xlu0 %788
      %790 = vrot.lane.b32.xlu0 %v656, 2
      %v791 = vpop.permute.xlu0 %790
      %792 = vrot.lane.b32.xlu0 %v657, 2
      %v793 = vpop.permute.xlu0 %792
      %794 = vrot.lane.b32.xlu0 %v658, 2
      %v795 = vpop.permute.xlu0 %794
      %796 = vrot.lane.b32.xlu0 %v659, 2
      %v797 = vpop.permute.xlu0 %796
      %798 = vrot.lane.b32.xlu0 %v660, 2
      %v799 = vpop.permute.xlu0 %798
      %800 = vrot.lane.b32.xlu0 %v661, 2
      %v801 = vpop.permute.xlu0 %800
      %802 = vrot.lane.b32.xlu0 %v662, 2
      %v803 = vpop.permute.xlu0 %802
      %804 = vrot.lane.b32.xlu0 %v663, 2
      %v805 = vpop.permute.xlu0 %804
      %vm822 = vcmask 7168
      %v823 = vsel %vm822, 1.0, %v263
      %v824 = vsel %vm822, 1.0, %v266
      %v825 = vsel %vm822, 1.0, %v269
      %v826 = vsel %vm822, 1.0, %v272
      %v827 = vsel %vm822, 1.0, %v275
      %v828 = vsel %vm822, 1.0, %v278
      %v829 = vsel %vm822, 1.0, %v281
      %v830 = vsel %vm822, 1.0, %v284
      %v831 = vsel %vm822, 1.0, %v287
      %v832 = vsel %vm822, 1.0, %v290
      %v833 = vsel %vm822, 1.0, %v293
      %v834 = vsel %vm822, 1.0, %v296
      %v835 = vsel %vm822, 1.0, %v299
      %v836 = vsel %vm822, 1.0, %v302
      %v837 = vsel %vm822, 1.0, %v305
      %v838 = vsel %vm822, 1.0, %v308
      %vm839 = vcmask 15360
      %v840 = vsel %vm839, %v823, %v775
      %v841 = vsel %vm839, %v824, %v777
      %v842 = vsel %vm839, %v825, %v779
      %v843 = vsel %vm839, %v826, %v781
      %v844 = vsel %vm839, %v827, %v783
      %v845 = vsel %vm839, %v828, %v785
      %v846 = vsel %vm839, %v829, %v787
      %v847 = vsel %vm839, %v830, %v789
      %v848 = vsel %vm839, %v831, %v791
      %v849 = vsel %vm839, %v832, %v793
      %v850 = vsel %vm839, %v833, %v795
      %v851 = vsel %vm839, %v834, %v797
      %v852 = vsel %vm839, %v835, %v799
      %v853 = vsel %vm839, %v836, %v801
      %v854 = vsel %vm839, %v837, %v803
      %v855 = vsel %vm839, %v838, %v805
      %856 = vxpose.xlu0.b32.start [1/16] %v840, 128
      %857 = vxpose.xlu0.b32.cont [2/16] %v841, 128
      %858 = vxpose.xlu0.b32.cont [3/16] %v842, 128
      %859 = vxpose.xlu0.b32.cont [4/16] %v843, 128
      %860 = vxpose.xlu0.b32.cont [5/16] %v844, 128
      %861 = vxpose.xlu0.b32.cont [6/16] %v845, 128
      %862 = vxpose.xlu0.b32.cont [7/16] %v846, 128
      %863 = vxpose.xlu0.b32.cont [8/16] %v847, 128
      %864 = vxpose.xlu0.b32.cont [9/16] %v848, 128
      %865 = vxpose.xlu0.b32.cont [10/16] %v849, 128
      %866 = vxpose.xlu0.b32.cont [11/16] %v850, 128
      %867 = vxpose.xlu0.b32.cont [12/16] %v851, 128
      %868 = vxpose.xlu0.b32.cont [13/16] %v852, 128
      %869 = vxpose.xlu0.b32.cont [14/16] %v853, 128
      %870 = vxpose.xlu0.b32.cont [15/16] %v854, 128
      %871 = vxpose.xlu0.b32.end [16/16] %v855, 128
      %v872 = vpop.trf.xlu0
      %v873 = vpop.trf.xlu0
      %v874 = vpop.trf.xlu0
      %v875 = vpop.trf.xlu0
      %v876 = vpop.trf.xlu0
      %v877 = vpop.trf.xlu0
      %v878 = vpop.trf.xlu0
      %v879 = vpop.trf.xlu0
      %v880 = vpop.trf.xlu0
      %v881 = vpop.trf.xlu0
      %v882 = vpop.trf.xlu0
      %v883 = vpop.trf.xlu0
      %v884 = vpop.trf.xlu0
      %v885 = vpop.trf.xlu0
      %v886 = vpop.trf.xlu0
      %v887 = vpop.trf.xlu0
      %888 = vmatprep.subr.mxu0 0.0
      %v889 = vand.u32 %v757, 4294901760
      %890 = vmatpush1.msra.mxu0 %v889
      %891 = vmatprep.subr.mxu0 0.0
      %v892 = vand.u32 %v756, 4294901760
      %893 = vmatpush1.msra.mxu0 %v892
      %894 = vmatprep.subr.mxu0 0.0
      %v895 = vand.u32 %v755, 4294901760
      %896 = vmatpush1.msra.mxu0 %v895
      %897 = vmatprep.subr.mxu0 0.0
      %v898 = vand.u32 %v754, 4294901760
      %899 = vmatpush1.msra.mxu0 %v898
      %900 = vmatprep.subr.mxu0 0.0
      %v901 = vand.u32 %v753, 4294901760
      %902 = vmatpush1.msra.mxu0 %v901
      %903 = vmatprep.subr.mxu0 0.0
      %v904 = vand.u32 %v752, 4294901760
      %905 = vmatpush1.msra.mxu0 %v904
      %906 = vmatprep.subr.mxu0 0.0
      %v907 = vand.u32 %v751, 4294901760
      %908 = vmatpush1.msra.mxu0 %v907
      %909 = vmatprep.subr.mxu0 0.0
      %v910 = vand.u32 %v750, 4294901760
      %911 = vmatpush1.msra.mxu0 %v910
      %912 = vmatprep.subr.mxu0 0.0
      %v913 = vand.u32 %v749, 4294901760
      %914 = vmatpush1.msra.mxu0 %v913
      %915 = vmatprep.subr.mxu0 0.0
      %v916 = vand.u32 %v748, 4294901760
      %917 = vmatpush1.msra.mxu0 %v916
      %918 = vmatprep.subr.mxu0 0.0
      %v919 = vand.u32 %v747, 4294901760
      %920 = vmatpush1.msra.mxu0 %v919
      %921 = vmatprep.subr.mxu0 0.0
      %v922 = vand.u32 %v746, 4294901760
      %923 = vmatpush1.msra.mxu0 %v922
      %924 = vmatprep.subr.mxu0 0.0
      %v925 = vand.u32 %v745, 4294901760
      %926 = vmatpush1.msra.mxu0 %v925
      %927 = vmatprep.subr.mxu0 0.0
      %v928 = vand.u32 %v744, 4294901760
      %929 = vmatpush1.msra.mxu0 %v928
      %930 = vmatprep.subr.mxu0 0.0
      %v931 = vand.u32 %v743, 4294901760
      %932 = vmatpush1.msra.mxu0 %v931
      %933 = vmatprep.subr.mxu0 0.0
      %v934 = vand.u32 %v742, 4294901760
      %935 = vmatpush1.msra.mxu0 %v934
      %936 = vmatprep.subr.mxu0 0.0
      %937 = vmatpush2.msra.mxu0 0.0
      %938 = vmatprep.subr.mxu0 0.0
      %939 = vmatpush2.msra.mxu0 0.0
      %940 = vmatprep.subr.mxu0 0.0
      %941 = vmatpush2.msra.mxu0 0.0
      %942 = vmatprep.subr.mxu0 0.0
      %943 = vmatpush2.msra.mxu0 0.0
      %944 = vmatprep.subr.mxu0 0.0
      %945 = vmatpush2.msra.mxu0 0.0
      %946 = vmatprep.subr.mxu0 0.0
      %947 = vmatpush2.msra.mxu0 0.0
      %948 = vmatprep.subr.mxu0 0.0
      %949 = vmatpush2.msra.mxu0 0.0
      %950 = vmatprep.subr.mxu0 0.0
      %951 = vmatpush2.msra.mxu0 0.0
      %952 = vmatprep.subr.mxu0 0.0
      %953 = vmatpush2.msra.mxu0 0.0
      %954 = vmatprep.subr.mxu0 0.0
      %955 = vmatpush2.msra.mxu0 0.0
      %956 = vmatprep.subr.mxu0 0.0
      %957 = vmatpush2.msra.mxu0 0.0
      %958 = vmatprep.subr.mxu0 0.0
      %959 = vmatpush2.msra.mxu0 0.0
      %960 = vmatprep.subr.mxu0 0.0
      %961 = vmatpush2.msra.mxu0 0.0
      %962 = vmatprep.subr.mxu0 0.0
      %963 = vmatpush2.msra.mxu0 0.0
      %964 = vmatprep.subr.mxu0 0.0
      %965 = vmatpush2.msra.mxu0 0.0
      %966 = vmatprep.subr.mxu0 0.0
      %967 = vmatpush2.msra.mxu0 0.0
      %968 = vmatprep.mubr.f32.mxu0 0.0
      %v969 = vand.u32 %v872, 4294901760
      %v970 = vsub.f32 %v872, %v969
      %v971 = vand.u32 %v970, 4294901760
      %v972 = vsub.f32 %v970, %v971
      %v973 = vand.u32 %v972, 4294901760
      %974 = vmatmul.mubr.f32.gmra.mxu0 %v973
      %v975 = vpop.f32.mrf.mxu0
      %v976 = vadd.f32 0.0, %v975
      %v977 = vpop.f32.mrf.mxu0
      %978 = vdwg.mxu0
      %979 = vmatprep.subr.mxu0 0.0
      %v980 = vand.u32 %v757, 4294901760
      %v981 = vsub.f32 %v757, %v980
      %v982 = vand.u32 %v981, 4294901760
      %v983 = vsub.f32 %v981, %v982
      %v984 = vand.u32 %v983, 4294901760
      %985 = vmatpush1.msra.mxu0 %v984
      %986 = vmatprep.subr.mxu0 0.0
      %v987 = vand.u32 %v756, 4294901760
      %v988 = vsub.f32 %v756, %v987
      %v989 = vand.u32 %v988, 4294901760
      %v990 = vsub.f32 %v988, %v989
      %v991 = vand.u32 %v990, 4294901760
      %992 = vmatpush1.msra.mxu0 %v991
      %993 = vmatprep.subr.mxu0 0.0
      %v994 = vand.u32 %v755, 4294901760
      %v995 = vsub.f32 %v755, %v994
      %v996 = vand.u32 %v995, 4294901760
      %v997 = vsub.f32 %v995, %v996
      %v998 = vand.u32 %v997, 4294901760
      %999 = vmatpush1.msra.mxu0 %v998
      %1000 = vmatprep.subr.mxu0 0.0
      %v1001 = vand.u32 %v754, 4294901760
      %v1002 = vsub.f32 %v754, %v1001
      %v1003 = vand.u32 %v1002, 4294901760
      %v1004 = vsub.f32 %v1002, %v1003
      %v1005 = vand.u32 %v1004, 4294901760
      %1006 = vmatpush1.msra.mxu0 %v1005
      %1007 = vmatprep.subr.mxu0 0.0
      %v1008 = vand.u32 %v753, 4294901760
      %v1009 = vsub.f32 %v753, %v1008
      %v1010 = vand.u32 %v1009, 4294901760
      %v1011 = vsub.f32 %v1009, %v1010
      %v1012 = vand.u32 %v1011, 4294901760
      %1013 = vmatpush1.msra.mxu0 %v1012
      %1014 = vmatprep.subr.mxu0 0.0
      %v1015 = vand.u32 %v752, 4294901760
      %v1016 = vsub.f32 %v752, %v1015
      %v1017 = vand.u32 %v1016, 4294901760
      %v1018 = vsub.f32 %v1016, %v1017
      %v1019 = vand.u32 %v1018, 4294901760
      %1020 = vmatpush1.msra.mxu0 %v1019
      %1021 = vmatprep.subr.mxu0 0.0
      %v1022 = vand.u32 %v751, 4294901760
      %v1023 = vsub.f32 %v751, %v1022
      %v1024 = vand.u32 %v1023, 4294901760
      %v1025 = vsub.f32 %v1023, %v1024
      %v1026 = vand.u32 %v1025, 4294901760
      %1027 = vmatpush1.msra.mxu0 %v1026
      %1028 = vmatprep.subr.mxu0 0.0
      %v1029 = vand.u32 %v750, 4294901760
      %v1030 = vsub.f32 %v750, %v1029
      %v1031 = vand.u32 %v1030, 4294901760
      %v1032 = vsub.f32 %v1030, %v1031
      %v1033 = vand.u32 %v1032, 4294901760
      %1034 = vmatpush1.msra.mxu0 %v1033
      %1035 = vmatprep.subr.mxu0 0.0
      %v1036 = vand.u32 %v749, 4294901760
      %v1037 = vsub.f32 %v749, %v1036
      %v1038 = vand.u32 %v1037, 4294901760
      %v1039 = vsub.f32 %v1037, %v1038
      %v1040 = vand.u32 %v1039, 4294901760
      %1041 = vmatpush1.msra.mxu0 %v1040
      %1042 = vmatprep.subr.mxu0 0.0
      %v1043 = vand.u32 %v748, 4294901760
      %v1044 = vsub.f32 %v748, %v1043
      %v1045 = vand.u32 %v1044, 4294901760
      %v1046 = vsub.f32 %v1044, %v1045
      %v1047 = vand.u32 %v1046, 4294901760
      %1048 = vmatpush1.msra.mxu0 %v1047
      %1049 = vmatprep.subr.mxu0 0.0
      %v1050 = vand.u32 %v747, 4294901760
      %v1051 = vsub.f32 %v747, %v1050
      %v1052 = vand.u32 %v1051, 4294901760
      %v1053 = vsub.f32 %v1051, %v1052
      %v1054 = vand.u32 %v1053, 4294901760
      %1055 = vmatpush1.msra.mxu0 %v1054
      %1056 = vmatprep.subr.mxu0 0.0
      %v1057 = vand.u32 %v746, 4294901760
      %v1058 = vsub.f32 %v746, %v1057
      %v1059 = vand.u32 %v1058, 4294901760
      %v1060 = vsub.f32 %v1058, %v1059
      %v1061 = vand.u32 %v1060, 4294901760
      %1062 = vmatpush1.msra.mxu0 %v1061
      %1063 = vmatprep.subr.mxu0 0.0
      %v1064 = vand.u32 %v745, 4294901760
      %v1065 = vsub.f32 %v745, %v1064
      %v1066 = vand.u32 %v1065, 4294901760
      %v1067 = vsub.f32 %v1065, %v1066
      %v1068 = vand.u32 %v1067, 4294901760
      %1069 = vmatpush1.msra.mxu0 %v1068
      %1070 = vmatprep.subr.mxu0 0.0
      %v1071 = vand.u32 %v744, 4294901760
      %v1072 = vsub.f32 %v744, %v1071
      %v1073 = vand.u32 %v1072, 4294901760
      %v1074 = vsub.f32 %v1072, %v1073
      %v1075 = vand.u32 %v1074, 4294901760
      %1076 = vmatpush1.msra.mxu0 %v1075
      %1077 = vmatprep.subr.mxu0 0.0
      %v1078 = vand.u32 %v743, 4294901760
      %v1079 = vsub.f32 %v743, %v1078
      %v1080 = vand.u32 %v1079, 4294901760
      %v1081 = vsub.f32 %v1079, %v1080
      %v1082 = vand.u32 %v1081, 4294901760
      %1083 = vmatpush1.msra.mxu0 %v1082
      %1084 = vmatprep.subr.mxu0 0.0
      %v1085 = vand.u32 %v742, 4294901760
      %v1086 = vsub.f32 %v742, %v1085
      %v1087 = vand.u32 %v1086, 4294901760
      %v1088 = vsub.f32 %v1086, %v1087
      %v1089 = vand.u32 %v1088, 4294901760
      %1090 = vmatpush1.msra.mxu0 %v1089
      %1091 = vmatprep.subr.mxu0 0.0
      %1092 = vmatpush2.msra.mxu0 0.0
      %1093 = vmatprep.subr.mxu0 0.0
      %1094 = vmatpush2.msra.mxu0 0.0
      %1095 = vmatprep.subr.mxu0 0.0
      %1096 = vmatpush2.msra.mxu0 0.0
      %1097 = vmatprep.subr.mxu0 0.0
      %1098 = vmatpush2.msra.mxu0 0.0
      %1099 = vmatprep.subr.mxu0 0.0
      %1100 = vmatpush2.msra.mxu0 0.0
      %1101 = vmatprep.subr.mxu0 0.0
      %1102 = vmatpush2.msra.mxu0 0.0
      %1103 = vmatprep.subr.mxu0 0.0
      %1104 = vmatpush2.msra.mxu0 0.0
      %1105 = vmatprep.subr.mxu0 0.0
      %1106 = vmatpush2.msra.mxu0 0.0
      %1107 = vmatprep.subr.mxu0 0.0
      %1108 = vmatpush2.msra.mxu0 0.0
      %1109 = vmatprep.subr.mxu0 0.0
      %1110 = vmatpush2.msra.mxu0 0.0
      %1111 = vmatprep.subr.mxu0 0.0
      %1112 = vmatpush2.msra.mxu0 0.0
      %1113 = vmatprep.subr.mxu0 0.0
      %1114 = vmatpush2.msra.mxu0 0.0
      %1115 = vmatprep.subr.mxu0 0.0
      %1116 = vmatpush2.msra.mxu0 0.0
      %1117 = vmatprep.subr.mxu0 0.0
      %1118 = vmatpush2.msra.mxu0 0.0
      %1119 = vmatprep.subr.mxu0 0.0
      %1120 = vmatpush2.msra.mxu0 0.0
      %1121 = vmatprep.subr.mxu0 0.0
      %1122 = vmatpush2.msra.mxu0 0.0
      %1123 = vmatprep.mubr.f32.mxu0 0.0
      %v1124 = vand.u32 %v872, 4294901760
      %1125 = vmatmul.mubr.f32.gmra.mxu0 %v1124
      %v1126 = vpop.f32.mrf.mxu0
      %v1127 = vadd.f32 %v976, %v1126
      %v1128 = vpop.f32.mrf.mxu0
      %1129 = vdwg.mxu0
      %1130 = vmatprep.subr.mxu0 0.0
      %v1131 = vand.u32 %v757, 4294901760
      %v1132 = vsub.f32 %v757, %v1131
      %1133 = vmatpush1.msra.mxu0 %v1132
      %1134 = vmatprep.subr.mxu0 0.0
      %v1135 = vand.u32 %v756, 4294901760
      %v1136 = vsub.f32 %v756, %v1135
      %1137 = vmatpush1.msra.mxu0 %v1136
      %1138 = vmatprep.subr.mxu0 0.0
      %v1139 = vand.u32 %v755, 4294901760
      %v1140 = vsub.f32 %v755, %v1139
      %1141 = vmatpush1.msra.mxu0 %v1140
      %1142 = vmatprep.subr.mxu0 0.0
      %v1143 = vand.u32 %v754, 4294901760
      %v1144 = vsub.f32 %v754, %v1143
      %1145 = vmatpush1.msra.mxu0 %v1144
      %1146 = vmatprep.subr.mxu0 0.0
      %v1147 = vand.u32 %v753, 4294901760
      %v1148 = vsub.f32 %v753, %v1147
      %1149 = vmatpush1.msra.mxu0 %v1148
      %1150 = vmatprep.subr.mxu0 0.0
      %v1151 = vand.u32 %v752, 4294901760
      %v1152 = vsub.f32 %v752, %v1151
      %1153 = vmatpush1.msra.mxu0 %v1152
      %1154 = vmatprep.subr.mxu0 0.0
      %v1155 = vand.u32 %v751, 4294901760
      %v1156 = vsub.f32 %v751, %v1155
      %1157 = vmatpush1.msra.mxu0 %v1156
      %1158 = vmatprep.subr.mxu0 0.0
      %v1159 = vand.u32 %v750, 4294901760
      %v1160 = vsub.f32 %v750, %v1159
      %1161 = vmatpush1.msra.mxu0 %v1160
      %1162 = vmatprep.subr.mxu0 0.0
      %v1163 = vand.u32 %v749, 4294901760
      %v1164 = vsub.f32 %v749, %v1163
      %1165 = vmatpush1.msra.mxu0 %v1164
      %1166 = vmatprep.subr.mxu0 0.0
      %v1167 = vand.u32 %v748, 4294901760
      %v1168 = vsub.f32 %v748, %v1167
      %1169 = vmatpush1.msra.mxu0 %v1168
      %1170 = vmatprep.subr.mxu0 0.0
      %v1171 = vand.u32 %v747, 4294901760
      %v1172 = vsub.f32 %v747, %v1171
      %1173 = vmatpush1.msra.mxu0 %v1172
      %1174 = vmatprep.subr.mxu0 0.0
      %v1175 = vand.u32 %v746, 4294901760
      %v1176 = vsub.f32 %v746, %v1175
      %1177 = vmatpush1.msra.mxu0 %v1176
      %1178 = vmatprep.subr.mxu0 0.0
      %v1179 = vand.u32 %v745, 4294901760
      %v1180 = vsub.f32 %v745, %v1179
      %1181 = vmatpush1.msra.mxu0 %v1180
      %1182 = vmatprep.subr.mxu0 0.0
      %v1183 = vand.u32 %v744, 4294901760
      %v1184 = vsub.f32 %v744, %v1183
      %1185 = vmatpush1.msra.mxu0 %v1184
      %1186 = vmatprep.subr.mxu0 0.0
      %v1187 = vand.u32 %v743, 4294901760
      %v1188 = vsub.f32 %v743, %v1187
      %1189 = vmatpush1.msra.mxu0 %v1188
      %1190 = vmatprep.subr.mxu0 0.0
      %v1191 = vand.u32 %v742, 4294901760
      %v1192 = vsub.f32 %v742, %v1191
      %1193 = vmatpush1.msra.mxu0 %v1192
      %1194 = vmatprep.subr.mxu0 0.0
      %1195 = vmatpush2.msra.mxu0 0.0
      %1196 = vmatprep.subr.mxu0 0.0
      %1197 = vmatpush2.msra.mxu0 0.0
      %1198 = vmatprep.subr.mxu0 0.0
      %1199 = vmatpush2.msra.mxu0 0.0
      %1200 = vmatprep.subr.mxu0 0.0
      %1201 = vmatpush2.msra.mxu0 0.0
      %1202 = vmatprep.subr.mxu0 0.0
      %1203 = vmatpush2.msra.mxu0 0.0
      %1204 = vmatprep.subr.mxu0 0.0
      %1205 = vmatpush2.msra.mxu0 0.0
      %1206 = vmatprep.subr.mxu0 0.0
      %1207 = vmatpush2.msra.mxu0 0.0
      %1208 = vmatprep.subr.mxu0 0.0
      %1209 = vmatpush2.msra.mxu0 0.0
      %1210 = vmatprep.subr.mxu0 0.0
      %1211 = vmatpush2.msra.mxu0 0.0
      %1212 = vmatprep.subr.mxu0 0.0
      %1213 = vmatpush2.msra.mxu0 0.0
      %1214 = vmatprep.subr.mxu0 0.0
      %1215 = vmatpush2.msra.mxu0 0.0
      %1216 = vmatprep.subr.mxu0 0.0
      %1217 = vmatpush2.msra.mxu0 0.0
      %1218 = vmatprep.subr.mxu0 0.0
      %1219 = vmatpush2.msra.mxu0 0.0
      %1220 = vmatprep.subr.mxu0 0.0
      %1221 = vmatpush2.msra.mxu0 0.0
      %1222 = vmatprep.subr.mxu0 0.0
      %1223 = vmatpush2.msra.mxu0 0.0
      %1224 = vmatprep.subr.mxu0 0.0
      %1225 = vmatpush2.msra.mxu0 0.0
      %1226 = vmatprep.mubr.f32.mxu0 0.0
      %v1227 = vand.u32 %v872, 4294901760
      %v1228 = vsub.f32 %v872, %v1227
      %1229 = vmatmul.mubr.f32.gmra.mxu0 %v1228
      %v1230 = vpop.f32.mrf.mxu0
      %v1231 = vadd.f32 %v1127, %v1230
      %v1232 = vpop.f32.mrf.mxu0
      %1233 = vdwg.mxu0
      %1234 = vmatprep.subr.mxu0 0.0
      %v1235 = vand.u32 %v757, 4294901760
      %1236 = vmatpush1.msra.mxu0 %v1235
      %1237 = vmatprep.subr.mxu0 0.0
      %v1238 = vand.u32 %v756, 4294901760
      %1239 = vmatpush1.msra.mxu0 %v1238
      %1240 = vmatprep.subr.mxu0 0.0
      %v1241 = vand.u32 %v755, 4294901760
      %1242 = vmatpush1.msra.mxu0 %v1241
      %1243 = vmatprep.subr.mxu0 0.0
      %v1244 = vand.u32 %v754, 4294901760
      %1245 = vmatpush1.msra.mxu0 %v1244
      %1246 = vmatprep.subr.mxu0 0.0
      %v1247 = vand.u32 %v753, 4294901760
      %1248 = vmatpush1.msra.mxu0 %v1247
      %1249 = vmatprep.subr.mxu0 0.0
      %v1250 = vand.u32 %v752, 4294901760
      %1251 = vmatpush1.msra.mxu0 %v1250
      %1252 = vmatprep.subr.mxu0 0.0
      %v1253 = vand.u32 %v751, 4294901760
      %1254 = vmatpush1.msra.mxu0 %v1253
      %1255 = vmatprep.subr.mxu0 0.0
      %v1256 = vand.u32 %v750, 4294901760
      %1257 = vmatpush1.msra.mxu0 %v1256
      %1258 = vmatprep.subr.mxu0 0.0
      %v1259 = vand.u32 %v749, 4294901760
      %1260 = vmatpush1.msra.mxu0 %v1259
      %1261 = vmatprep.subr.mxu0 0.0
      %v1262 = vand.u32 %v748, 4294901760
      %1263 = vmatpush1.msra.mxu0 %v1262
      %1264 = vmatprep.subr.mxu0 0.0
      %v1265 = vand.u32 %v747, 4294901760
      %1266 = vmatpush1.msra.mxu0 %v1265
      %1267 = vmatprep.subr.mxu0 0.0
      %v1268 = vand.u32 %v746, 4294901760
      %1269 = vmatpush1.msra.mxu0 %v1268
      %1270 = vmatprep.subr.mxu0 0.0
      %v1271 = vand.u32 %v745, 4294901760
      %1272 = vmatpush1.msra.mxu0 %v1271
      %1273 = vmatprep.subr.mxu0 0.0
      %v1274 = vand.u32 %v744, 4294901760
      %1275 = vmatpush1.msra.mxu0 %v1274
      %1276 = vmatprep.subr.mxu0 0.0
      %v1277 = vand.u32 %v743, 4294901760
      %1278 = vmatpush1.msra.mxu0 %v1277
      %1279 = vmatprep.subr.mxu0 0.0
      %v1280 = vand.u32 %v742, 4294901760
      %1281 = vmatpush1.msra.mxu0 %v1280
      %1282 = vmatprep.subr.mxu0 0.0
      %1283 = vmatpush2.msra.mxu0 0.0
      %1284 = vmatprep.subr.mxu0 0.0
      %1285 = vmatpush2.msra.mxu0 0.0
      %1286 = vmatprep.subr.mxu0 0.0
      %1287 = vmatpush2.msra.mxu0 0.0
      %1288 = vmatprep.subr.mxu0 0.0
      %1289 = vmatpush2.msra.mxu0 0.0
      %1290 = vmatprep.subr.mxu0 0.0
      %1291 = vmatpush2.msra.mxu0 0.0
      %1292 = vmatprep.subr.mxu0 0.0
      %1293 = vmatpush2.msra.mxu0 0.0
      %1294 = vmatprep.subr.mxu0 0.0
      %1295 = vmatpush2.msra.mxu0 0.0
      %1296 = vmatprep.subr.mxu0 0.0
      %1297 = vmatpush2.msra.mxu0 0.0
      %1298 = vmatprep.subr.mxu0 0.0
      %1299 = vmatpush2.msra.mxu0 0.0
      %1300 = vmatprep.subr.mxu0 0.0
      %1301 = vmatpush2.msra.mxu0 0.0
      %1302 = vmatprep.subr.mxu0 0.0
      %1303 = vmatpush2.msra.mxu0 0.0
      %1304 = vmatprep.subr.mxu0 0.0
      %1305 = vmatpush2.msra.mxu0 0.0
      %1306 = vmatprep.subr.mxu0 0.0
      %1307 = vmatpush2.msra.mxu0 0.0
      %1308 = vmatprep.subr.mxu0 0.0
      %1309 = vmatpush2.msra.mxu0 0.0
      %1310 = vmatprep.subr.mxu0 0.0
      %1311 = vmatpush2.msra.mxu0 0.0
      %1312 = vmatprep.subr.mxu0 0.0
      %1313 = vmatpush2.msra.mxu0 0.0
      %1314 = vmatprep.mubr.f32.mxu0 0.0
      %v1315 = vand.u32 %v872, 4294901760
      %v1316 = vsub.f32 %v872, %v1315
      %v1317 = vand.u32 %v1316, 4294901760
      %1318 = vmatmul.mubr.f32.gmra.mxu0 %v1317
      %v1319 = vpop.f32.mrf.mxu0
      %v1320 = vadd.f32 %v1231, %v1319
      %v1321 = vpop.f32.mrf.mxu0
      %1322 = vdwg.mxu0
      %1323 = vmatprep.subr.mxu0 0.0
      %v1324 = vand.u32 %v757, 4294901760
      %v1325 = vsub.f32 %v757, %v1324
      %v1326 = vand.u32 %v1325, 4294901760
      %1327 = vmatpush1.msra.mxu0 %v1326
      %1328 = vmatprep.subr.mxu0 0.0
      %v1329 = vand.u32 %v756, 4294901760
      %v1330 = vsub.f32 %v756, %v1329
      %v1331 = vand.u32 %v1330, 4294901760
      %1332 = vmatpush1.msra.mxu0 %v1331
      %1333 = vmatprep.subr.mxu0 0.0
      %v1334 = vand.u32 %v755, 4294901760
      %v1335 = vsub.f32 %v755, %v1334
      %v1336 = vand.u32 %v1335, 4294901760
      %1337 = vmatpush1.msra.mxu0 %v1336
      %1338 = vmatprep.subr.mxu0 0.0
      %v1339 = vand.u32 %v754, 4294901760
      %v1340 = vsub.f32 %v754, %v1339
      %v1341 = vand.u32 %v1340, 4294901760
      %1342 = vmatpush1.msra.mxu0 %v1341
      %1343 = vmatprep.subr.mxu0 0.0
      %v1344 = vand.u32 %v753, 4294901760
      %v1345 = vsub.f32 %v753, %v1344
      %v1346 = vand.u32 %v1345, 4294901760
      %1347 = vmatpush1.msra.mxu0 %v1346
      %1348 = vmatprep.subr.mxu0 0.0
      %v1349 = vand.u32 %v752, 4294901760
      %v1350 = vsub.f32 %v752, %v1349
      %v1351 = vand.u32 %v1350, 4294901760
      %1352 = vmatpush1.msra.mxu0 %v1351
      %1353 = vmatprep.subr.mxu0 0.0
      %v1354 = vand.u32 %v751, 4294901760
      %v1355 = vsub.f32 %v751, %v1354
      %v1356 = vand.u32 %v1355, 4294901760
      %1357 = vmatpush1.msra.mxu0 %v1356
      %1358 = vmatprep.subr.mxu0 0.0
      %v1359 = vand.u32 %v750, 4294901760
      %v1360 = vsub.f32 %v750, %v1359
      %v1361 = vand.u32 %v1360, 4294901760
      %1362 = vmatpush1.msra.mxu0 %v1361
      %1363 = vmatprep.subr.mxu0 0.0
      %v1364 = vand.u32 %v749, 4294901760
      %v1365 = vsub.f32 %v749, %v1364
      %v1366 = vand.u32 %v1365, 4294901760
      %1367 = vmatpush1.msra.mxu0 %v1366
      %1368 = vmatprep.subr.mxu0 0.0
      %v1369 = vand.u32 %v748, 4294901760
      %v1370 = vsub.f32 %v748, %v1369
      %v1371 = vand.u32 %v1370, 4294901760
      %1372 = vmatpush1.msra.mxu0 %v1371
      %1373 = vmatprep.subr.mxu0 0.0
      %v1374 = vand.u32 %v747, 4294901760
      %v1375 = vsub.f32 %v747, %v1374
      %v1376 = vand.u32 %v1375, 4294901760
      %1377 = vmatpush1.msra.mxu0 %v1376
      %1378 = vmatprep.subr.mxu0 0.0
      %v1379 = vand.u32 %v746, 4294901760
      %v1380 = vsub.f32 %v746, %v1379
      %v1381 = vand.u32 %v1380, 4294901760
      %1382 = vmatpush1.msra.mxu0 %v1381
      %1383 = vmatprep.subr.mxu0 0.0
      %v1384 = vand.u32 %v745, 4294901760
      %v1385 = vsub.f32 %v745, %v1384
      %v1386 = vand.u32 %v1385, 4294901760
      %1387 = vmatpush1.msra.mxu0 %v1386
      %1388 = vmatprep.subr.mxu0 0.0
      %v1389 = vand.u32 %v744, 4294901760
      %v1390 = vsub.f32 %v744, %v1389
      %v1391 = vand.u32 %v1390, 4294901760
      %1392 = vmatpush1.msra.mxu0 %v1391
      %1393 = vmatprep.subr.mxu0 0.0
      %v1394 = vand.u32 %v743, 4294901760
      %v1395 = vsub.f32 %v743, %v1394
      %v1396 = vand.u32 %v1395, 4294901760
      %1397 = vmatpush1.msra.mxu0 %v1396
      %1398 = vmatprep.subr.mxu0 0.0
      %v1399 = vand.u32 %v742, 4294901760
      %v1400 = vsub.f32 %v742, %v1399
      %v1401 = vand.u32 %v1400, 4294901760
      %1402 = vmatpush1.msra.mxu0 %v1401
      %1403 = vmatprep.subr.mxu0 0.0
      %1404 = vmatpush2.msra.mxu0 0.0
      %1405 = vmatprep.subr.mxu0 0.0
      %1406 = vmatpush2.msra.mxu0 0.0
      %1407 = vmatprep.subr.mxu0 0.0
      %1408 = vmatpush2.msra.mxu0 0.0
      %1409 = vmatprep.subr.mxu0 0.0
      %1410 = vmatpush2.msra.mxu0 0.0
      %1411 = vmatprep.subr.mxu0 0.0
      %1412 = vmatpush2.msra.mxu0 0.0
      %1413 = vmatprep.subr.mxu0 0.0
      %1414 = vmatpush2.msra.mxu0 0.0
      %1415 = vmatprep.subr.mxu0 0.0
      %1416 = vmatpush2.msra.mxu0 0.0
      %1417 = vmatprep.subr.mxu0 0.0
      %1418 = vmatpush2.msra.mxu0 0.0
      %1419 = vmatprep.subr.mxu0 0.0
      %1420 = vmatpush2.msra.mxu0 0.0
      %1421 = vmatprep.subr.mxu0 0.0
      %1422 = vmatpush2.msra.mxu0 0.0
      %1423 = vmatprep.subr.mxu0 0.0
      %1424 = vmatpush2.msra.mxu0 0.0
      %1425 = vmatprep.subr.mxu0 0.0
      %1426 = vmatpush2.msra.mxu0 0.0
      %1427 = vmatprep.subr.mxu0 0.0
      %1428 = vmatpush2.msra.mxu0 0.0
      %1429 = vmatprep.subr.mxu0 0.0
      %1430 = vmatpush2.msra.mxu0 0.0
      %1431 = vmatprep.subr.mxu0 0.0
      %1432 = vmatpush2.msra.mxu0 0.0
      %1433 = vmatprep.subr.mxu0 0.0
      %1434 = vmatpush2.msra.mxu0 0.0
      %1435 = vmatprep.mubr.f32.mxu0 0.0
      %v1436 = vand.u32 %v872, 4294901760
      %1437 = vmatmul.mubr.f32.gmra.mxu0 %v1436
      %v1438 = vpop.f32.mrf.mxu0
      %v1439 = vadd.f32 %v1320, %v1438
      %v1440 = vpop.f32.mrf.mxu0
      %1441 = vdwg.mxu0
      %1442 = vmatprep.subr.mxu0 0.0
      %v1443 = vand.u32 %v757, 4294901760
      %1444 = vmatpush1.msra.mxu0 %v1443
      %1445 = vmatprep.subr.mxu0 0.0
      %v1446 = vand.u32 %v756, 4294901760
      %1447 = vmatpush1.msra.mxu0 %v1446
      %1448 = vmatprep.subr.mxu0 0.0
      %v1449 = vand.u32 %v755, 4294901760
      %1450 = vmatpush1.msra.mxu0 %v1449
      %1451 = vmatprep.subr.mxu0 0.0
      %v1452 = vand.u32 %v754, 4294901760
      %1453 = vmatpush1.msra.mxu0 %v1452
      %1454 = vmatprep.subr.mxu0 0.0
      %v1455 = vand.u32 %v753, 4294901760
      %1456 = vmatpush1.msra.mxu0 %v1455
      %1457 = vmatprep.subr.mxu0 0.0
      %v1458 = vand.u32 %v752, 4294901760
      %1459 = vmatpush1.msra.mxu0 %v1458
      %1460 = vmatprep.subr.mxu0 0.0
      %v1461 = vand.u32 %v751, 4294901760
      %1462 = vmatpush1.msra.mxu0 %v1461
      %1463 = vmatprep.subr.mxu0 0.0
      %v1464 = vand.u32 %v750, 4294901760
      %1465 = vmatpush1.msra.mxu0 %v1464
      %1466 = vmatprep.subr.mxu0 0.0
      %v1467 = vand.u32 %v749, 4294901760
      %1468 = vmatpush1.msra.mxu0 %v1467
      %1469 = vmatprep.subr.mxu0 0.0
      %v1470 = vand.u32 %v748, 4294901760
      %1471 = vmatpush1.msra.mxu0 %v1470
      %1472 = vmatprep.subr.mxu0 0.0
      %v1473 = vand.u32 %v747, 4294901760
      %1474 = vmatpush1.msra.mxu0 %v1473
      %1475 = vmatprep.subr.mxu0 0.0
      %v1476 = vand.u32 %v746, 4294901760
      %1477 = vmatpush1.msra.mxu0 %v1476
      %1478 = vmatprep.subr.mxu0 0.0
      %v1479 = vand.u32 %v745, 4294901760
      %1480 = vmatpush1.msra.mxu0 %v1479
      %1481 = vmatprep.subr.mxu0 0.0
      %v1482 = vand.u32 %v744, 4294901760
      %1483 = vmatpush1.msra.mxu0 %v1482
      %1484 = vmatprep.subr.mxu0 0.0
      %v1485 = vand.u32 %v743, 4294901760
      %1486 = vmatpush1.msra.mxu0 %v1485
      %1487 = vmatprep.subr.mxu0 0.0
      %v1488 = vand.u32 %v742, 4294901760
      %1489 = vmatpush1.msra.mxu0 %v1488
      %1490 = vmatprep.subr.mxu0 0.0
      %1491 = vmatpush2.msra.mxu0 0.0
      %1492 = vmatprep.subr.mxu0 0.0
      %1493 = vmatpush2.msra.mxu0 0.0
      %1494 = vmatprep.subr.mxu0 0.0
      %1495 = vmatpush2.msra.mxu0 0.0
      %1496 = vmatprep.subr.mxu0 0.0
      %1497 = vmatpush2.msra.mxu0 0.0
      %1498 = vmatprep.subr.mxu0 0.0
      %1499 = vmatpush2.msra.mxu0 0.0
      %1500 = vmatprep.subr.mxu0 0.0
      %1501 = vmatpush2.msra.mxu0 0.0
      %1502 = vmatprep.subr.mxu0 0.0
      %1503 = vmatpush2.msra.mxu0 0.0
      %1504 = vmatprep.subr.mxu0 0.0
      %1505 = vmatpush2.msra.mxu0 0.0
      %1506 = vmatprep.subr.mxu0 0.0
      %1507 = vmatpush2.msra.mxu0 0.0
      %1508 = vmatprep.subr.mxu0 0.0
      %1509 = vmatpush2.msra.mxu0 0.0
      %1510 = vmatprep.subr.mxu0 0.0
      %1511 = vmatpush2.msra.mxu0 0.0
      %1512 = vmatprep.subr.mxu0 0.0
      %1513 = vmatpush2.msra.mxu0 0.0
      %1514 = vmatprep.subr.mxu0 0.0
      %1515 = vmatpush2.msra.mxu0 0.0
      %1516 = vmatprep.subr.mxu0 0.0
      %1517 = vmatpush2.msra.mxu0 0.0
      %1518 = vmatprep.subr.mxu0 0.0
      %1519 = vmatpush2.msra.mxu0 0.0
      %1520 = vmatprep.subr.mxu0 0.0
      %1521 = vmatpush2.msra.mxu0 0.0
      %1522 = vmatprep.mubr.f32.mxu0 0.0
      %v1523 = vand.u32 %v872, 4294901760
      %1524 = vmatmul.mubr.f32.gmra.mxu0 %v1523
      %v1525 = vpop.f32.mrf.mxu0
      %v1526 = vadd.f32 %v1439, %v1525
      %v1527 = vpop.f32.mrf.mxu0
      %1528 = vdwg.mxu0
      %v1529 = vld [vmem:[%s237] sm:$0x7]
      %v1530 = vadd.f32 %v1529, %v1526
      %vm1531 = vcmask 239616
      %1532 = vst.msk [vmem:[%s237] sm:$0x7] %vm1531, %v1530
      %p1533 = scmp.lt.s32.totalorder %s19, 1
      %s1534 = scalar_select %p1533, %s19, 1
      %s1535 = smul.addr %s1534, 4
      %s1536 = scalar_lea.vmem %s4, %s1535
      // Predicated region
      $region41: #{ece_loss.1} parent=35 // pred_check
        %p1537 = pneg %p143
      $region42: #{ece_loss.1} parent=35 // pred_check_branch
        %1539 = sbr.rel (%p1537) target = $region44
      $region43: #{ece_loss.1} parent=35 // pred_region
        _
      $region44: #{ece_loss.1} parent=35 // pred_fallthru
        _
    $region36: #{ece_loss.1} parent=5 // pred_fallthru
      _
    %p1540 = scmp.le.s32.totalorder 2, %s10
    // Predicated region
    $region45: #{ece_loss.1} parent=5 // pred_check
      %p1541 = pneg %p1540
    $region46: #{ece_loss.1} parent=5 // pred_check_branch
      %1543 = sbr.rel (%p1541) target = $region48
    $region47: #{ece_loss.1} parent=5 // pred_region
      %s1544 = ssub.s32 %s10, 2
      // Predicated region
      $region49: #{ece_loss.1} parent=47 // pred_check
        %p1545 = pneg %p149
      $region50: #{ece_loss.1} parent=47 // pred_check_branch
        %1547 = sbr.rel (%p1545) target = $region52
      $region51: #{ece_loss.1} parent=47 // pred_region
        %p1548 = scmp.lt.s32.totalorder %s21, 1
        %s1549 = scalar_select %p1548, %s21, 1
        %s1550 = smul.addr %s1549, 4
        %s1551 = scalar_lea.vmem %s4, %s1550
      $region52: #{ece_loss.1} parent=47 // pred_fallthru
        _
    $region48: #{ece_loss.1} parent=5 // pred_fallthru
      _
  $region6: #{ece_loss.1} parent=0 // loop_footer
    %s14 = sadd.s32 1, %s10
  $region7: #{ece_loss.1} parent=0 // loop_footer_branch
    %9 = sbr.rel target = $region3
  $region8: #{ece_loss.1} parent=0 // loop_exit
    _

</llo_original>
